<compile_context>
chip_gen: v7x
topology: tpu7x:2x2x1
jax: 0.10.0
libtpu: 0.0.40
codegen_flags: <defaults>
</compile_context>

<pallas_src>
import jax
import jax.numpy as jnp
from jax.experimental import pallas as pl
from jax.experimental.pallas import tpu as pltpu


# ----------------------------- Pallas kernel -------------------------------
def _matmul_bias_relu_kernel(x_ref, w_ref, bias_ref, o_ref):
    acc = jnp.dot(x_ref[...], w_ref[...], preferred_element_type=jnp.float32)
    o_ref[...] = jnp.maximum(acc + bias_ref[...], 0.0).astype(o_ref.dtype)


def _round_up(x, m):
    return (x + m - 1) // m * m


def _pick_tile_m(m, k, cout_p, budget_bytes=10 * 1024 * 1024):
    """Largest M-tile (multiple of 8) whose pipelined VMEM footprint fits."""
    m_cap = max(8, _round_up(m, 8))
    tile = 8
    for cand in (16, 32, 64, 128, 256, 512, 1024):
        if cand > m_cap:
            break
        need = (2 * cand * k * 2          # double-buffered bf16 patch tiles
                + 2 * cand * cout_p * 4   # double-buffered output tiles
                + 2 * k * cout_p * 2      # resident bf16 weights (x2 margin)
                + 2 * cout_p * 4)         # bias
        if need <= budget_bytes:
            tile = cand
        else:
            break
    return min(tile, m_cap)


def fused_matmul_bias_relu(patches, w_mat, bias, out_dtype=jnp.float32):
    """relu(patches @ w_mat + bias).

    patches: [M, K] (any float, cast to bf16), w_mat: [K, Cout] f32 with the
    BN scale already folded in, bias: [Cout] f32.  Returns [M, Cout] out_dtype.
    """
    m, k = patches.shape
    cout = w_mat.shape[1]
    cout_p = _round_up(cout, 128)              # lane-dense output stores

    x = patches.astype(jnp.bfloat16)
    w = w_mat.astype(jnp.bfloat16)
    if cout_p != cout:
        w = jnp.pad(w, ((0, 0), (0, cout_p - cout)))
    b = jnp.pad(bias.astype(jnp.float32), (0, cout_p - cout)).reshape(1, cout_p)

    tile_m = _pick_tile_m(m, k, cout_p)
    m_p = _round_up(m, tile_m)
    if m_p != m:
        x = jnp.pad(x, ((0, m_p - m), (0, 0)))

    out_bytes = m_p * cout_p * jnp.dtype(out_dtype).itemsize
    cost = pl.CostEstimate(
        flops=2 * m_p * k * cout_p,
        transcendentals=0,
        bytes_accessed=m_p * k * 2 + k * cout_p * 2 + cout_p * 4 + out_bytes,
    )

    out = pl.pallas_call(
        _matmul_bias_relu_kernel,
        out_shape=jax.ShapeDtypeStruct((m_p, cout_p), out_dtype),
        grid=(m_p // tile_m,),
        in_specs=[
            pl.BlockSpec((tile_m, k), lambda i: (i, 0)),
            pl.BlockSpec((k, cout_p), lambda i: (0, 0)),
            pl.BlockSpec((1, cout_p), lambda i: (0, 0)),
        ],
        out_specs=pl.BlockSpec((tile_m, cout_p), lambda i: (i, 0)),
        compiler_params=pltpu.CompilerParams(
            dimension_semantics=("parallel",),
            vmem_limit_bytes=32 * 1024 * 1024,
        ),
        cost_estimate=cost,
    )(x, w, b)
    return out[:m, :cout]


# ------------------------------ JAX glue ------------------------------------
def _im2col(x_nhwc, kh, kw, stride, padding):
    """Extract conv patches -> [N*Hout*Wout, kh*kw*Cin] (kh, kw, cin order)."""
    n, h, w, c = x_nhwc.shape
    xp = jnp.pad(x_nhwc, ((0, 0), (padding, padding), (padding, padding), (0, 0)))
    hout = (h + 2 * padding - kh) // stride + 1
    wout = (w + 2 * padding - kw) // stride + 1
    cols = []
    for i in range(kh):
        for j in range(kw):
            cols.append(
                xp[:, i:i + stride * (hout - 1) + 1:stride,
                      j:j + stride * (wout - 1) + 1:stride, :])
    patches = jnp.concatenate(cols, axis=-1)  # [N, Hout, Wout, kh*kw*C]
    return patches.reshape(n * hout * wout, kh * kw * c), (n, hout, wout)


def _bn_fold(gamma, beta, mean, var, conv_bias, eps=1e-3):
    scale = gamma / jnp.sqrt(var + eps)
    bias = (conv_bias - mean) * scale + beta
    return scale, bias


def conv2d_bn_relu(x_nhwc, w_oihw, scale, bias, stride, padding,
                   out_dtype=jnp.float32):
    cout, cin, kh, kw = w_oihw.shape
    # OIHW -> HWIO -> [KH*KW*Cin, Cout] (matches im2col kh,kw,cin ordering);
    # BN scale folded into weight columns so the kernel epilogue is add+relu.
    w_mat = jnp.transpose(w_oihw, (2, 3, 1, 0)).reshape(kh * kw * cin, cout)
    w_mat = w_mat * scale[None, :]
    patches, (n, hout, wout) = _im2col(x_nhwc.astype(jnp.bfloat16),
                                       kh, kw, stride, padding)
    out = fused_matmul_bias_relu(patches, w_mat, bias, out_dtype)
    return out.reshape(n, hout, wout, cout)


def conv_transpose2d_bn_relu(x_nhwc, w_iohw, scale, bias, stride, padding,
                             output_padding, out_dtype=jnp.float32):
    """ConvTranspose2d + BN + ReLU via sub-pixel (phase) decomposition.

    out[oh, ow] = sum over (ih, kh), (iw, kw) with ih*s + kh - p = oh (same
    for W axis) of in[ih, iw] @ W[:, :, kh, kw].  For each output phase
    (oh mod s, ow mod s) this is a tiny stride-1 conv on the LOW-res input,
    so no dilated/mostly-zero tensor is ever built.
    """
    cin, cout, kh, kw = w_iohw.shape
    n, h, w, _ = x_nhwc.shape
    s = stride
    hout = (h - 1) * s - 2 * padding + kh + output_padding
    wout = (w - 1) * s - 2 * padding + kw + output_padding
    assert hout == h * s and wout == w * s, (
        "phase decomposition assumes out = in * stride "
        "(true for kernel=3, padding=1, output_padding=stride-1)")

    def taps(r, ksize):
        t = []
        for kk in range(ksize):
            if (r + padding - kk) % s == 0:
                t.append((kk, (r + padding - kk) // s))
        return t

    pad = max(kh, kw)  # generous halo for the shifted low-res slices
    xb = jnp.pad(x_nhwc.astype(jnp.bfloat16),
                 ((0, 0), (pad, pad), (pad, pad), (0, 0)))
    relu_bias = jnp.maximum(bias, 0.0).astype(out_dtype)

    rows = []
    for rh in range(s):
        th = taps(rh, kh)
        cols_out = []
        for rw in range(s):
            tw = taps(rw, kw)
            if not th or not tw:
                # No kernel tap lands on this phase: output is relu(bn_bias).
                o = jnp.broadcast_to(relu_bias, (n, h, w, cout))
            else:
                cols, wrows = [], []
                for (tap_kh, dh) in th:
                    for (tap_kw, dw) in tw:
                        cols.append(xb[:, pad + dh:pad + dh + h,
                                       pad + dw:pad + dw + w, :])
                        wrows.append(w_iohw[:, :, tap_kh, tap_kw])  # [Cin,Cout]
                patches = jnp.concatenate(cols, axis=-1).reshape(n * h * w, -1)
                w_mat = jnp.concatenate(wrows, axis=0) * scale[None, :]
                o = fused_matmul_bias_relu(patches, w_mat, bias, out_dtype)
                o = o.reshape(n, h, w, cout)
            cols_out.append(o)
        rows.append(jnp.stack(cols_out, axis=0))      # [s, N, H, W, Cout]
    allp = jnp.stack(rows, axis=0)                    # [s_rh, s_rw, N, H, W, C]
    out = jnp.transpose(allp, (2, 3, 0, 4, 1, 5)).reshape(n, h * s, w * s, cout)
    return out


# --------------------------- parameters & forward ---------------------------
def init_params(key, input_dim, compress_ratio):
    cdim = input_dim // compress_ratio
    ks = jax.random.split(key, 18)

    def nrm(k, shape, sc=0.05):
        return sc * jax.random.normal(k, shape, jnp.float32)

    def var_init(k, shape):
        return 1.0 + 0.1 * jnp.abs(jax.random.normal(k, shape, jnp.float32))

    return {
        # encoder: Conv2d(C, C//r, 3, stride, pad=1) + BN + ReLU
        "enc_w": nrm(ks[0], (cdim, input_dim, 3, 3)),      # OIHW
        "enc_b": nrm(ks[1], (cdim,)),
        "enc_bn_g": 1.0 + nrm(ks[2], (cdim,)),
        "enc_bn_b": nrm(ks[3], (cdim,)),
        "enc_bn_m": nrm(ks[4], (cdim,)),
        "enc_bn_v": var_init(ks[5], (cdim,)),
        # decoder[0]: ConvTranspose2d(C//r, C, 3, stride, pad=1, out_pad=stride-1)
        "dec1_w": nrm(ks[6], (cdim, input_dim, 3, 3)),     # [Cin, Cout, KH, KW]
        "dec1_b": nrm(ks[7], (input_dim,)),
        "dec1_bn_g": 1.0 + nrm(ks[8], (input_dim,)),
        "dec1_bn_b": nrm(ks[9], (input_dim,)),
        "dec1_bn_m": nrm(ks[10], (input_dim,)),
        "dec1_bn_v": var_init(ks[11], (input_dim,)),
        # decoder[3]: Conv2d(C, C, 3, stride=1, pad=1)
        "dec2_w": nrm(ks[12], (input_dim, input_dim, 3, 3)),  # OIHW
        "dec2_b": nrm(ks[13], (input_dim,)),
        "dec2_bn_g": 1.0 + nrm(ks[14], (input_dim,)),
        "dec2_bn_b": nrm(ks[15], (input_dim,)),
        "dec2_bn_m": nrm(ks[16], (input_dim,)),
        "dec2_bn_v": var_init(ks[17], (input_dim,)),
    }


def improved_compressor_forward(params, x_nchw, stride=4, use_fp16=False):
    eps = 1e-3  # matches nn.BatchNorm2d(eps=0.001)
    x = jnp.transpose(x_nchw, (0, 2, 3, 1))  # NCHW -> NHWC

    # encoder: Conv + BN + ReLU
    s, b = _bn_fold(params["enc_bn_g"], params["enc_bn_b"],
                    params["enc_bn_m"], params["enc_bn_v"],
                    params["enc_b"], eps)
    x = conv2d_bn_relu(x, params["enc_w"], s, b, stride=stride, padding=1,
                       out_dtype=jnp.float32)

    if use_fp16:
        # NOTE: float16 is emulated on TPU; kept to mirror the PyTorch
        # .half()/.float() round-trip semantics.
        x = x.astype(jnp.float16).astype(jnp.float32)

    # decoder: ConvTranspose + BN + ReLU (phase decomposition)
    s, b = _bn_fold(params["dec1_bn_g"], params["dec1_bn_b"],
                    params["dec1_bn_m"], params["dec1_bn_v"],
                    params["dec1_b"], eps)
    x = conv_transpose2d_bn_relu(x, params["dec1_w"], s, b, stride=stride,
                                 padding=1, output_padding=stride - 1,
                                 out_dtype=jnp.bfloat16)

    # decoder: Conv + BN + ReLU
    s, b = _bn_fold(params["dec2_bn_g"], params["dec2_bn_b"],
                    params["dec2_bn_m"], params["dec2_bn_v"],
                    params["dec2_b"], eps)
    x = conv2d_bn_relu(x, params["dec2_w"], s, b, stride=1, padding=1,
                       out_dtype=jnp.float32)

    return jnp.transpose(x, (0, 3, 1, 2))  # NHWC -> NCHW


if __name__ == "__main__":
    input_dim, compress_ratio, stride = 32, 4, 4
    N, H, W = 2, 16, 16

    key = jax.random.PRNGKey(0)
    kx, kp = jax.random.split(key)
    x = jax.random.normal(kx, (N, input_dim, H, W), jnp.float32)
    params = init_params(kp, input_dim, compress_ratio)

    fwd = jax.jit(improved_compressor_forward,
                  static_argnames=("stride", "use_fp16"))
    out = fwd(params, x, stride=stride, use_fp16=False)
    out = jax.block_until_ready(out)
    assert out.shape == (N, input_dim, H, W), out.shape
    assert jnp.all(jnp.isfinite(out))
    print("KERNEL_OK")
</pallas_src>

<mosaic_0001>
module attributes {stable_mosaic.version = 11 : i64} {
  func.func @_matmul_bias_relu_kernel(%arg0: i32, %arg1: memref<32x288xbf16, #tpu.memory_space<vmem>>, %arg2: memref<288x128xbf16, #tpu.memory_space<vmem>>, %arg3: memref<1x128xf32, #tpu.memory_space<vmem>>, %arg4: memref<32x128xf32, #tpu.memory_space<vmem>>) attributes {dimension_semantics = [#tpu.dimension_semantics<parallel>], iteration_bounds = array<i64: 1>, scalar_prefetch = 0 : i64, scratch_operands = 0 : i64, tpu.core_type = #tpu.core_type<tc>, window_params = [{transform_indices = @transform_0, window_bounds = array<i64: 32, 288>}, {pipeline_mode = #tpu.pipeline_mode<synchronous>, transform_indices = @transform_1, window_bounds = array<i64: 288, 128>}, {pipeline_mode = #tpu.pipeline_mode<synchronous>, transform_indices = @transform_2, window_bounds = array<i64: 1, 128>}, {transform_indices = @transform_3, window_bounds = array<i64: 32, 128>}]} {
    %c0 = arith.constant 0 : index
    %c0_0 = arith.constant 0 : index
    %0 = vector.load %arg1[%c0, %c0_0] : memref<32x288xbf16, #tpu.memory_space<vmem>>, vector<32x288xbf16>
    %c0_1 = arith.constant 0 : index
    %c0_2 = arith.constant 0 : index
    %1 = vector.load %arg2[%c0_1, %c0_2] : memref<288x128xbf16, #tpu.memory_space<vmem>>, vector<288x128xbf16>
    %cst = arith.constant dense<0.000000e+00> : vector<32x128xf32>
    %2 = tpu.matmul %0, %1, %cst {dimension_numbers = #tpu.dot_dimension_numbers<[1], [0], [0], [1], [0, 0, 1, 1], [], []>} : vector<32x288xbf16>, vector<288x128xbf16>, vector<32x128xf32> -> vector<32x128xf32>
    %c0_3 = arith.constant 0 : index
    %c0_4 = arith.constant 0 : index
    %3 = vector.load %arg3[%c0_3, %c0_4] : memref<1x128xf32, #tpu.memory_space<vmem>>, vector<1x128xf32>
    %4 = vector.broadcast %3 : vector<1x128xf32> to vector<32x128xf32>
    %5 = arith.addf %2, %4 : vector<32x128xf32>
    %cst_5 = arith.constant 0.000000e+00 : f32
    %6 = vector.broadcast %cst_5 : f32 to vector<32x128xf32>
    %7 = arith.maximumf %5, %6 : vector<32x128xf32>
    %c0_6 = arith.constant 0 : index
    %c0_7 = arith.constant 0 : index
    %8 = vector.load %arg4[%c0_6, %c0_7] : memref<32x128xf32, #tpu.memory_space<vmem>>, vector<32x128xf32>
    tpu.vector_store %arg4[%c0_6, %c0_7], %7 {strides = array<i32>} : memref<32x128xf32, #tpu.memory_space<vmem>>, vector<32x128xf32>,
    return
  }
  func.func @transform_0(%arg0: i32) -> (i32, i32) {
    %c0_i32 = arith.constant 0 : i32
    %c0_i32_0 = arith.constant 0 : i32
    return %arg0, %c0_i32 : i32, i32
  }
  func.func @transform_1(%arg0: i32) -> (i32, i32) {
    %c0_i32 = arith.constant 0 : i32
    %c0_i32_0 = arith.constant 0 : i32
    %c0_i32_1 = arith.constant 0 : i32
    return %c0_i32, %c0_i32_0 : i32, i32
  }
  func.func @transform_2(%arg0: i32) -> (i32, i32) {
    %c0_i32 = arith.constant 0 : i32
    %c0_i32_0 = arith.constant 0 : i32
    %c0_i32_1 = arith.constant 0 : i32
    return %c0_i32, %c0_i32_0 : i32, i32
  }
  func.func @transform_3(%arg0: i32) -> (i32, i32) {
    %c0_i32 = arith.constant 0 : i32
    %c0_i32_0 = arith.constant 0 : i32
    return %arg0, %c0_i32 : i32, i32
  }
}

module attributes {stable_mosaic.version = 11 : i64} {
  func.func @_matmul_bias_relu_kernel(%arg0: i32, %arg1: memref<32x8xbf16, #tpu.memory_space<vmem>>, %arg2: memref<8x128xbf16, #tpu.memory_space<vmem>>, %arg3: memref<1x128xf32, #tpu.memory_space<vmem>>, %arg4: memref<32x128xbf16, #tpu.memory_space<vmem>>) attributes {dimension_semantics = [#tpu.dimension_semantics<parallel>], iteration_bounds = array<i64: 1>, scalar_prefetch = 0 : i64, scratch_operands = 0 : i64, tpu.core_type = #tpu.core_type<tc>, window_params = [{transform_indices = @transform_0, window_bounds = array<i64: 32, 8>}, {pipeline_mode = #tpu.pipeline_mode<synchronous>, transform_indices = @transform_1, window_bounds = array<i64: 8, 128>}, {pipeline_mode = #tpu.pipeline_mode<synchronous>, transform_indices = @transform_2, window_bounds = array<i64: 1, 128>}, {transform_indices = @transform_3, window_bounds = array<i64: 32, 128>}]} {
    %c0 = arith.constant 0 : index
    %c0_0 = arith.constant 0 : index
    %0 = vector.load %arg1[%c0, %c0_0] : memref<32x8xbf16, #tpu.memory_space<vmem>>, vector<32x8xbf16>
    %c0_1 = arith.constant 0 : index
    %c0_2 = arith.constant 0 : index
    %1 = vector.load %arg2[%c0_1, %c0_2] : memref<8x128xbf16, #tpu.memory_space<vmem>>, vector<8x128xbf16>
    %cst = arith.constant dense<0.000000e+00> : vector<32x128xf32>
    %2 = tpu.matmul %0, %1, %cst {dimension_numbers = #tpu.dot_dimension_numbers<[1], [0], [0], [1], [0, 0, 1, 1], [], []>} : vector<32x8xbf16>, vector<8x128xbf16>, vector<32x128xf32> -> vector<32x128xf32>
    %c0_3 = arith.constant 0 : index
    %c0_4 = arith.constant 0 : index
    %3 = vector.load %arg3[%c0_3, %c0_4] : memref<1x128xf32, #tpu.memory_space<vmem>>, vector<1x128xf32>
    %4 = vector.broadcast %3 : vector<1x128xf32> to vector<32x128xf32>
    %5 = arith.addf %2, %4 : vector<32x128xf32>
    %cst_5 = arith.constant 0.000000e+00 : f32
    %6 = vector.broadcast %cst_5 : f32 to vector<32x128xf32>
    %7 = arith.maximumf %5, %6 : vector<32x128xf32>
    %8 = arith.truncf %7 : vector<32x128xf32> to vector<32x128xbf16>
    %c0_6 = arith.constant 0 : index
    %c0_7 = arith.constant 0 : index
    %9 = vector.load %arg4[%c0_6, %c0_7] : memref<32x128xbf16, #tpu.memory_space<vmem>>, vector<32x128xbf16>
    tpu.vector_store %arg4[%c0_6, %c0_7], %8 {strides = array<i32>} : memref<32x128xbf16, #tpu.memory_space<vmem>>, vector<32x128xbf16>,
    return
  }
  func.func @transform_0(%arg0: i32) -> (i32, i32) {
    %c0_i32 = arith.constant 0 : i32
    %c0_i32_0 = arith.constant 0 : i32
    return %arg0, %c0_i32 : i32, i32
  }
  func.func @transform_1(%arg0: i32) -> (i32, i32) {
    %c0_i32 = arith.constant 0 : i32
    %c0_i32_0 = arith.constant 0 : i32
    %c0_i32_1 = arith.constant 0 : i32
    return %c0_i32, %c0_i32_0 : i32, i32
  }
  func.func @transform_2(%arg0: i32) -> (i32, i32) {
    %c0_i32 = arith.constant 0 : i32
    %c0_i32_0 = arith.constant 0 : i32
    %c0_i32_1 = arith.constant 0 : i32
    return %c0_i32, %c0_i32_0 : i32, i32
  }
  func.func @transform_3(%arg0: i32) -> (i32, i32) {
    %c0_i32 = arith.constant 0 : i32
    %c0_i32_0 = arith.constant 0 : i32
    return %arg0, %c0_i32 : i32, i32
  }
}

module attributes {stable_mosaic.version = 11 : i64} {
  func.func @_matmul_bias_relu_kernel(%arg0: i32, %arg1: memref<512x288xbf16, #tpu.memory_space<vmem>>, %arg2: memref<288x128xbf16, #tpu.memory_space<vmem>>, %arg3: memref<1x128xf32, #tpu.memory_space<vmem>>, %arg4: memref<512x128xf32, #tpu.memory_space<vmem>>) attributes {dimension_semantics = [#tpu.dimension_semantics<parallel>], iteration_bounds = array<i64: 1>, scalar_prefetch = 0 : i64, scratch_operands = 0 : i64, tpu.core_type = #tpu.core_type<tc>, window_params = [{transform_indices = @transform_0, window_bounds = array<i64: 512, 288>}, {pipeline_mode = #tpu.pipeline_mode<synchronous>, transform_indices = @transform_1, window_bounds = array<i64: 288, 128>}, {pipeline_mode = #tpu.pipeline_mode<synchronous>, transform_indices = @transform_2, window_bounds = array<i64: 1, 128>}, {transform_indices = @transform_3, window_bounds = array<i64: 512, 128>}]} {
    %c0 = arith.constant 0 : index
    %c0_0 = arith.constant 0 : index
    %0 = vector.load %arg1[%c0, %c0_0] : memref<512x288xbf16, #tpu.memory_space<vmem>>, vector<512x288xbf16>
    %c0_1 = arith.constant 0 : index
    %c0_2 = arith.constant 0 : index
    %1 = vector.load %arg2[%c0_1, %c0_2] : memref<288x128xbf16, #tpu.memory_space<vmem>>, vector<288x128xbf16>
    %cst = arith.constant dense<0.000000e+00> : vector<512x128xf32>
    %2 = tpu.matmul %0, %1, %cst {dimension_numbers = #tpu.dot_dimension_numbers<[1], [0], [0], [1], [0, 0, 1, 1], [], []>} : vector<512x288xbf16>, vector<288x128xbf16>, vector<512x128xf32> -> vector<512x128xf32>
    %c0_3 = arith.constant 0 : index
    %c0_4 = arith.constant 0 : index
    %3 = vector.load %arg3[%c0_3, %c0_4] : memref<1x128xf32, #tpu.memory_space<vmem>>, vector<1x128xf32>
    %4 = vector.broadcast %3 : vector<1x128xf32> to vector<512x128xf32>
    %5 = arith.addf %2, %4 : vector<512x128xf32>
    %cst_5 = arith.constant 0.000000e+00 : f32
    %6 = vector.broadcast %cst_5 : f32 to vector<512x128xf32>
    %7 = arith.maximumf %5, %6 : vector<512x128xf32>
    %c0_6 = arith.constant 0 : index
    %c0_7 = arith.constant 0 : index
    %8 = vector.load %arg4[%c0_6, %c0_7] : memref<512x128xf32, #tpu.memory_space<vmem>>, vector<512x128xf32>
    tpu.vector_store %arg4[%c0_6, %c0_7], %7 {strides = array<i32>} : memref<512x128xf32, #tpu.memory_space<vmem>>, vector<512x128xf32>,
    return
  }
  func.func @transform_0(%arg0: i32) -> (i32, i32) {
    %c0_i32 = arith.constant 0 : i32
    %c0_i32_0 = arith.constant 0 : i32
    return %arg0, %c0_i32 : i32, i32
  }
  func.func @transform_1(%arg0: i32) -> (i32, i32) {
    %c0_i32 = arith.constant 0 : i32
    %c0_i32_0 = arith.constant 0 : i32
    %c0_i32_1 = arith.constant 0 : i32
    return %c0_i32, %c0_i32_0 : i32, i32
  }
  func.func @transform_2(%arg0: i32) -> (i32, i32) {
    %c0_i32 = arith.constant 0 : i32
    %c0_i32_0 = arith.constant 0 : i32
    %c0_i32_1 = arith.constant 0 : i32
    return %c0_i32, %c0_i32_0 : i32, i32
  }
  func.func @transform_3(%arg0: i32) -> (i32, i32) {
    %c0_i32 = arith.constant 0 : i32
    %c0_i32_0 = arith.constant 0 : i32
    return %arg0, %c0_i32 : i32, i32
  }
}

</mosaic_0001>

<llo_original>
// kernel: improved_compressor_forward.17
$region0: #{improved_compressor_forward.17}
  #allocation0 [shape = 'u32[]', space=smem, size = 0x4, offset = 0x4, fixed_abs, tag = 'smem constant byte address 0x4 - core index']
  #allocation1 [shape = 'u32[144,128]{1,0:T(1,128)}', space=vmem, size = 0x12000, scoped, tag = 'internal scratch']
  %s0 = inlined_call_operand.vmem [shape: bf16[32,8], index: 0, kind: input, shape index: {}]
  %s1 = inlined_call_operand.vmem [shape: bf16[8,128], index: 1, kind: input, shape index: {}]
  %s2 = inlined_call_operand.vmem [shape: f32[1,128], index: 2, kind: input, shape index: {}]
  %s3 = inlined_call_operand.vmem [shape: bf16[32,128], index: 3, kind: output, shape index: {}]
  %s4 = sld [smem:[#allocation0]]
  $region22: #{improved_compressor_forward.17} parent=0
    _
  %s6 = ssub.s32 1, %s4
  %s7 = scalar_select 0, %s6, %s4
  // Predicated region
  $region2: #{improved_compressor_forward.17} parent=0 // pred_check
    _
  $region3: #{improved_compressor_forward.17} parent=0 // pred_check_branch
    %9 = sbr.rel (0) target = $region5
  $region4: #{improved_compressor_forward.17} parent=0 // pred_region
    _
  $region5: #{improved_compressor_forward.17} parent=0 // pred_fallthru
    _
  // Predicated region
  $region6: #{improved_compressor_forward.17} parent=0 // pred_check
    _
  $region7: #{improved_compressor_forward.17} parent=0 // pred_check_branch
    %11 = sbr.rel (0) target = $region9
  $region8: #{improved_compressor_forward.17} parent=0 // pred_region
    _
  $region9: #{improved_compressor_forward.17} parent=0 // pred_fallthru
    _
  // Predicated region
  $region10: #{improved_compressor_forward.17} parent=0 // pred_check
    _
  $region11: #{improved_compressor_forward.17} parent=0 // pred_check_branch
    %13 = sbr.rel (0) target = $region13
  $region12: #{improved_compressor_forward.17} parent=0 // pred_region
    _
  $region13: #{improved_compressor_forward.17} parent=0 // pred_fallthru
    _
  %v15 = vld [vmem:[%s0] sm:$0xf]
  %v16 = vld [vmem:[%s0 + $0x4] sm:$0xf]
  %v17 = vld [vmem:[%s0 + $0x8] sm:$0xf]
  %v18 = vld [vmem:[%s0 + $0xc] sm:$0xf]
  %v19 = vld [vmem:[%s1] sm:$0xf]
  %v20 = vld [vmem:[%s2] sm:$0x1]
  %v22 = vlaneseq
  %v23 = vshrl.u32 %v22, 7
  %v24 = vsub.s32 0, %v23
  %v25 = vrot.slane %v20, %v24
  %v31 = vunpack.c.l.b16 %v15
  %v32 = vunpack.c.l.b16 %v16
  %v33 = vunpack.c.l.b16 %v17
  %v34 = vunpack.c.l.b16 %v18
  %v35 = vpack.c.b16 %v32, %v31
  %v36 = vpack.c.b16 %v34, %v33
  %vm37 = vcmask 64512
  %v39 = vsel %vm37, %v35, 0
  %v42 = vsel %vm37, %v36, 0
  %vm44 = vcmask 1043456
  %v46 = vsel %vm44, %v19, 0
  %48 = vmatprep.subr.bf16.mxu0 0
  %49 = vmatpush1.bf16.msra.mxu0 %v46
  %50 = vmatprep.subr.bf16.mxu0 0
  %51 = vmatpush1.bf16.msra.mxu0 0
  %52 = vmatprep.subr.bf16.mxu0 0
  %53 = vmatpush1.bf16.msra.mxu0 0
  %54 = vmatprep.subr.bf16.mxu0 0
  %55 = vmatpush1.bf16.msra.mxu0 0
  %56 = vmatprep.subr.bf16.mxu0 0
  %57 = vmatpush1.bf16.msra.mxu0 0
  %58 = vmatprep.subr.bf16.mxu0 0
  %59 = vmatpush1.bf16.msra.mxu0 0
  %60 = vmatprep.subr.bf16.mxu0 0
  %61 = vmatpush1.bf16.msra.mxu0 0
  %62 = vmatprep.subr.bf16.mxu0 0
  %63 = vmatpush1.bf16.msra.mxu0 0
  %64 = vmatprep.subr.bf16.mxu0 0
  %65 = vmatpush1.bf16.msra.mxu0 0
  %66 = vmatprep.subr.bf16.mxu0 0
  %67 = vmatpush1.bf16.msra.mxu0 0
  %68 = vmatprep.subr.bf16.mxu0 0
  %69 = vmatpush1.bf16.msra.mxu0 0
  %70 = vmatprep.subr.bf16.mxu0 0
  %71 = vmatpush1.bf16.msra.mxu0 0
  %72 = vmatprep.subr.bf16.mxu0 0
  %73 = vmatpush1.bf16.msra.mxu0 0
  %74 = vmatprep.subr.bf16.mxu0 0
  %75 = vmatpush1.bf16.msra.mxu0 0
  %76 = vmatprep.subr.bf16.mxu0 0
  %77 = vmatpush1.bf16.msra.mxu0 0
  %78 = vmatprep.subr.bf16.mxu0 0
  %79 = vmatpush1.bf16.msra.mxu0 0
  %80 = vmatprep.mubr.bf16.mxu0 0
  %81 = vmatmul.mubr.bf16.gmra.mrb[0].mxu0 %v39
  %v82 = vpop.f32.mrb[0].mxu0
  %v83 = vadd.f32 %v25, %v82
  %v84 = vpop.f32.mrb[0].mxu0
  %v85 = vpop.f32.mrb[0].mxu0
  %v86 = vadd.f32 %v25, %v85
  %v87 = vpop.f32.mrb[0].mxu0
  %88 = vmatprep.mubr.bf16.mxu0 0
  %89 = vmatmul.mubr.bf16.gmra.mrb[0].mxu0 %v42
  %v90 = vpop.f32.mrb[0].mxu0
  %v91 = vadd.f32 %v25, %v90
  %v92 = vpop.f32.mrb[0].mxu0
  %v93 = vpop.f32.mrb[0].mxu0
  %v94 = vadd.f32 %v25, %v93
  %v95 = vpop.f32.mrb[0].mxu0
  %96 = vdwg.mxu0
  %v97 = vmax.f32 %v83, 0.0
  %v98 = vmax.f32 %v86, 0.0
  %v99 = vmax.f32 %v91, 0.0
  %v100 = vmax.f32 %v94, 0.0
  %v101 = vpack.c.bf16 %v98, %v97
  %v102 = vpack.c.bf16 %v100, %v99
  %v105 = vunpack.c.l.b16 %v101
  %v106 = vunpack.c.h.b16 %v101
  %v107 = vunpack.c.l.b16 %v102
  %v108 = vunpack.c.h.b16 %v102
  %v109 = vpack.c.b16 %v105, %v105
  %v110 = vpack.c.b16 %v106, %v106
  %v111 = vpack.c.b16 %v107, %v107
  %v112 = vpack.c.b16 %v108, %v108
  %117 = vst [vmem:[%s3] sm:$0xf] %v109
  %118 = vst [vmem:[%s3 + $0x4] sm:$0xf] %v110
  %119 = vst [vmem:[%s3 + $0x8] sm:$0xf] %v111
  %120 = vst [vmem:[%s3 + $0xc] sm:$0xf] %v112
  // Predicated region
  $region14: #{improved_compressor_forward.17} parent=0 // pred_check
    _
  $region15: #{improved_compressor_forward.17} parent=0 // pred_check_branch
    %122 = sbr.rel (0) target = $region17
  $region16: #{improved_compressor_forward.17} parent=0 // pred_region
    _
  $region17: #{improved_compressor_forward.17} parent=0 // pred_fallthru
    _
  // Predicated region
  $region18: #{improved_compressor_forward.17} parent=0 // pred_check
    _
  $region19: #{improved_compressor_forward.17} parent=0 // pred_check_branch
    %124 = sbr.rel (0) target = $region21
  $region20: #{improved_compressor_forward.17} parent=0 // pred_region
    _
  $region21: #{improved_compressor_forward.17} parent=0 // pred_fallthru
    _

// kernel: improved_compressor_forward.11
$region0: #{improved_compressor_forward.11}
  #allocation0 [shape = 'u32[]', space=smem, size = 0x4, offset = 0x4, fixed_abs, tag = 'smem constant byte address 0x4 - core index']
  #allocation1 [shape = 'u32[144,128]{1,0:T(1,128)}', space=vmem, size = 0x12000, scoped, tag = 'internal scratch']
  %s0 = inlined_call_operand.vmem [shape: bf16[32,288], index: 0, kind: input, shape index: {}]
  %s1 = inlined_call_operand.vmem [shape: bf16[288,128], index: 1, kind: input, shape index: {}]
  %s2 = inlined_call_operand.vmem [shape: f32[1,128], index: 2, kind: input, shape index: {}]
  %s3 = inlined_call_operand.vmem [shape: f32[32,128], index: 3, kind: output, shape index: {}]
  %s4 = sld [smem:[#allocation0]]
  $region22: #{improved_compressor_forward.11} parent=0
    _
  %s6 = ssub.s32 1, %s4
  %s7 = scalar_select 0, %s6, %s4
  // Predicated region
  $region2: #{improved_compressor_forward.11} parent=0 // pred_check
    _
  $region3: #{improved_compressor_forward.11} parent=0 // pred_check_branch
    %9 = sbr.rel (0) target = $region5
  $region4: #{improved_compressor_forward.11} parent=0 // pred_region
    _
  $region5: #{improved_compressor_forward.11} parent=0 // pred_fallthru
    _
  // Predicated region
  $region6: #{improved_compressor_forward.11} parent=0 // pred_check
    _
  $region7: #{improved_compressor_forward.11} parent=0 // pred_check_branch
    %11 = sbr.rel (0) target = $region9
  $region8: #{improved_compressor_forward.11} parent=0 // pred_region
    _
  $region9: #{improved_compressor_forward.11} parent=0 // pred_fallthru
    _
  // Predicated region
  $region10: #{improved_compressor_forward.11} parent=0 // pred_check
    _
  $region11: #{improved_compressor_forward.11} parent=0 // pred_check_branch
    %13 = sbr.rel (0) target = $region13
  $region12: #{improved_compressor_forward.11} parent=0 // pred_region
    _
  $region13: #{improved_compressor_forward.11} parent=0 // pred_fallthru
    _
  %v15 = vld [vmem:[%s0] sm:$0xff]
  %v16 = vld [vmem:[%s0 + $0x8] sm:$0xf]
  %v17 = vld [vmem:[%s0 + $0xc] sm:$0xff]
  %v18 = vld [vmem:[%s0 + $0x14] sm:$0xf]
  %v19 = vld [vmem:[%s0 + $0x18] sm:$0xff]
  %v20 = vld [vmem:[%s0 + $0x20] sm:$0xf]
  %v21 = vld [vmem:[%s0 + $0x24] sm:$0xff]
  %v22 = vld [vmem:[%s0 + $0x2c] sm:$0xf]
  %v23 = vld [vmem:[%s1] sm:$0xf]
  %v24 = vld [vmem:[%s1 + $0x4] sm:$0xf]
  %v25 = vld [vmem:[%s1 + $0x8] sm:$0xf]
  %v26 = vld [vmem:[%s1 + $0xc] sm:$0xf]
  %v27 = vld [vmem:[%s1 + $0x10] sm:$0xf]
  %v28 = vld [vmem:[%s1 + $0x14] sm:$0xf]
  %v29 = vld [vmem:[%s1 + $0x18] sm:$0xf]
  %v30 = vld [vmem:[%s1 + $0x1c] sm:$0xf]
  %v31 = vld [vmem:[%s1 + $0x20] sm:$0xf]
  %v32 = vld [vmem:[%s1 + $0x24] sm:$0xf]
  %v33 = vld [vmem:[%s1 + $0x28] sm:$0xf]
  %v34 = vld [vmem:[%s1 + $0x2c] sm:$0xf]
  %v35 = vld [vmem:[%s1 + $0x30] sm:$0xf]
  %v36 = vld [vmem:[%s1 + $0x34] sm:$0xf]
  %v37 = vld [vmem:[%s1 + $0x38] sm:$0xf]
  %v38 = vld [vmem:[%s1 + $0x3c] sm:$0xf]
  %v39 = vld [vmem:[%s1 + $0x40] sm:$0xf]
  %v40 = vld [vmem:[%s1 + $0x44] sm:$0xf]
  %v41 = vld [vmem:[%s1 + $0x48] sm:$0xf]
  %v42 = vld [vmem:[%s1 + $0x4c] sm:$0xf]
  %v43 = vld [vmem:[%s1 + $0x50] sm:$0xf]
  %v44 = vld [vmem:[%s1 + $0x54] sm:$0xf]
  %v45 = vld [vmem:[%s1 + $0x58] sm:$0xf]
  %v46 = vld [vmem:[%s1 + $0x5c] sm:$0xf]
  %v47 = vld [vmem:[%s1 + $0x60] sm:$0xf]
  %v48 = vld [vmem:[%s1 + $0x64] sm:$0xf]
  %v49 = vld [vmem:[%s1 + $0x68] sm:$0xf]
  %v50 = vld [vmem:[%s1 + $0x6c] sm:$0xf]
  %v51 = vld [vmem:[%s1 + $0x70] sm:$0xf]
  %v52 = vld [vmem:[%s1 + $0x74] sm:$0xf]
  %v53 = vld [vmem:[%s1 + $0x78] sm:$0xf]
  %v54 = vld [vmem:[%s1 + $0x7c] sm:$0xf]
  %v55 = vld [vmem:[%s1 + $0x80] sm:$0xf]
  %v56 = vld [vmem:[%s1 + $0x84] sm:$0xf]
  %v57 = vld [vmem:[%s1 + $0x88] sm:$0xf]
  %v58 = vld [vmem:[%s1 + $0x8c] sm:$0xf]
  %v59 = vld [vmem:[%s2] sm:$0x1]
  %v61 = vlaneseq
  %v62 = vshrl.u32 %v61, 7
  %v63 = vsub.s32 0, %v62
  %v64 = vrot.slane %v59, %v63
  %v74 = vunpack.c.l.b16 %v15
  %v75 = vunpack.c.h.b16 %v15
  %v76 = vunpack.c.l.b16 %v16
  %v77 = vunpack.c.l.b16 %v17
  %v78 = vunpack.c.h.b16 %v17
  %v79 = vunpack.c.l.b16 %v18
  %v80 = vunpack.c.l.b16 %v19
  %v81 = vunpack.c.h.b16 %v19
  %v82 = vunpack.c.l.b16 %v20
  %v83 = vunpack.c.l.b16 %v21
  %v84 = vunpack.c.h.b16 %v21
  %v85 = vunpack.c.l.b16 %v22
  %v86 = vpack.c.b16 %v77, %v74
  %v87 = vpack.c.b16 %v78, %v75
  %v88 = vpack.c.b16 %v79, %v76
  %v89 = vpack.c.b16 %v83, %v80
  %v90 = vpack.c.b16 %v84, %v81
  %v91 = vpack.c.b16 %v85, %v82
  %v132 = vunpack.c.l.b16 %v23
  %v133 = vunpack.c.l.b16 %v24
  %v134 = vunpack.c.l.b16 %v25
  %v135 = vunpack.c.l.b16 %v26
  %v136 = vunpack.c.l.b16 %v27
  %v137 = vunpack.c.l.b16 %v28
  %v138 = vunpack.c.l.b16 %v29
  %v139 = vunpack.c.l.b16 %v30
  %v140 = vunpack.c.l.b16 %v31
  %v141 = vunpack.c.l.b16 %v32
  %v142 = vunpack.c.l.b16 %v33
  %v143 = vunpack.c.l.b16 %v34
  %v144 = vunpack.c.l.b16 %v35
  %v145 = vunpack.c.l.b16 %v36
  %v146 = vunpack.c.l.b16 %v37
  %v147 = vunpack.c.l.b16 %v38
  %v148 = vunpack.c.l.b16 %v39
  %v149 = vunpack.c.l.b16 %v40
  %v150 = vunpack.c.l.b16 %v41
  %v151 = vunpack.c.l.b16 %v42
  %v152 = vunpack.c.l.b16 %v43
  %v153 = vunpack.c.l.b16 %v44
  %v154 = vunpack.c.l.b16 %v45
  %v155 = vunpack.c.l.b16 %v46
  %v156 = vunpack.c.l.b16 %v47
  %v157 = vunpack.c.l.b16 %v48
  %v158 = vunpack.c.l.b16 %v49
  %v159 = vunpack.c.l.b16 %v50
  %v160 = vunpack.c.l.b16 %v51
  %v161 = vunpack.c.l.b16 %v52
  %v162 = vunpack.c.l.b16 %v53
  %v163 = vunpack.c.l.b16 %v54
  %v164 = vunpack.c.l.b16 %v55
  %v165 = vunpack.c.l.b16 %v56
  %v166 = vunpack.c.l.b16 %v57
  %v167 = vunpack.c.l.b16 %v58
  %v168 = vpack.c.b16 %v133, %v132
  %v169 = vpack.c.b16 %v135, %v134
  %v170 = vpack.c.b16 %v137, %v136
  %v171 = vpack.c.b16 %v139, %v138
  %v172 = vpack.c.b16 %v141, %v140
  %v173 = vpack.c.b16 %v143, %v142
  %v174 = vpack.c.b16 %v145, %v144
  %v175 = vpack.c.b16 %v147, %v146
  %v176 = vpack.c.b16 %v149, %v148
  %v177 = vpack.c.b16 %v151, %v150
  %v178 = vpack.c.b16 %v153, %v152
  %v179 = vpack.c.b16 %v155, %v154
  %v180 = vpack.c.b16 %v157, %v156
  %v181 = vpack.c.b16 %v159, %v158
  %v182 = vpack.c.b16 %v161, %v160
  %v183 = vpack.c.b16 %v163, %v162
  %v184 = vpack.c.b16 %v165, %v164
  %v185 = vpack.c.b16 %v167, %v166
  %vm204 = vcmask 261120
  %v206 = vsel %vm204, %v88, 0
  %v209 = vsel %vm204, %v91, 0
  %211 = vmatprep.subr.bf16.mxu0 0
  %212 = vmatpush1.bf16.msra.mxu0 %v168
  %213 = vmatprep.subr.bf16.mxu0 0
  %214 = vmatpush1.bf16.msra.mxu0 %v169
  %215 = vmatprep.subr.bf16.mxu0 0
  %216 = vmatpush1.bf16.msra.mxu0 %v170
  %217 = vmatprep.subr.bf16.mxu0 0
  %218 = vmatpush1.bf16.msra.mxu0 %v171
  %219 = vmatprep.subr.bf16.mxu0 0
  %220 = vmatpush1.bf16.msra.mxu0 %v172
  %221 = vmatprep.subr.bf16.mxu0 0
  %222 = vmatpush1.bf16.msra.mxu0 %v173
  %223 = vmatprep.subr.bf16.mxu0 0
  %224 = vmatpush1.bf16.msra.mxu0 %v174
  %225 = vmatprep.subr.bf16.mxu0 0
  %226 = vmatpush1.bf16.msra.mxu0 %v175
  %227 = vmatprep.subr.bf16.mxu0 0
  %228 = vmatpush1.bf16.msra.mxu0 %v176
  %229 = vmatprep.subr.bf16.mxu0 0
  %230 = vmatpush1.bf16.msra.mxu0 %v177
  %231 = vmatprep.subr.bf16.mxu0 0
  %232 = vmatpush1.bf16.msra.mxu0 %v178
  %233 = vmatprep.subr.bf16.mxu0 0
  %234 = vmatpush1.bf16.msra.mxu0 %v179
  %235 = vmatprep.subr.bf16.mxu0 0
  %236 = vmatpush1.bf16.msra.mxu0 %v180
  %237 = vmatprep.subr.bf16.mxu0 0
  %238 = vmatpush1.bf16.msra.mxu0 %v181
  %239 = vmatprep.subr.bf16.mxu0 0
  %240 = vmatpush1.bf16.msra.mxu0 %v182
  %241 = vmatprep.subr.bf16.mxu0 0
  %242 = vmatpush1.bf16.msra.mxu0 %v183
  %243 = vmatprep.mubr.bf16.mxu0 %v87
  %244 = vmatmul.mubr.bf16.gmra.mrb[0].mxu0 %v86
  %v245 = vpop.f32.mrb[0].mxu0
  %v246 = vadd.f32 %v64, %v245
  %v247 = vpop.f32.mrb[0].mxu0
  %v248 = vpop.f32.mrb[0].mxu0
  %v249 = vadd.f32 %v64, %v248
  %v250 = vpop.f32.mrb[0].mxu0
  %251 = vmatprep.mubr.bf16.mxu0 %v90
  %252 = vmatmul.mubr.bf16.gmra.mrb[0].mxu0 %v89
  %v253 = vpop.f32.mrb[0].mxu0
  %v254 = vadd.f32 %v64, %v253
  %v255 = vpop.f32.mrb[0].mxu0
  %v256 = vpop.f32.mrb[0].mxu0
  %v257 = vadd.f32 %v64, %v256
  %v258 = vpop.f32.mrb[0].mxu0
  %259 = vdwg.mxu0
  %260 = vmatprep.subr.bf16.mxu0 0
  %261 = vmatpush1.bf16.msra.mxu0 %v184
  %262 = vmatprep.subr.bf16.mxu0 0
  %263 = vmatpush1.bf16.msra.mxu0 %v185
  %264 = vmatprep.subr.bf16.mxu0 0
  %265 = vmatpush1.bf16.msra.mxu0 0
  %266 = vmatprep.subr.bf16.mxu0 0
  %267 = vmatpush1.bf16.msra.mxu0 0
  %268 = vmatprep.subr.bf16.mxu0 0
  %269 = vmatpush1.bf16.msra.mxu0 0
  %270 = vmatprep.subr.bf16.mxu0 0
  %271 = vmatpush1.bf16.msra.mxu0 0
  %272 = vmatprep.subr.bf16.mxu0 0
  %273 = vmatpush1.bf16.msra.mxu0 0
  %274 = vmatprep.subr.bf16.mxu0 0
  %275 = vmatpush1.bf16.msra.mxu0 0
  %276 = vmatprep.subr.bf16.mxu0 0
  %277 = vmatpush1.bf16.msra.mxu0 0
  %278 = vmatprep.subr.bf16.mxu0 0
  %279 = vmatpush1.bf16.msra.mxu0 0
  %280 = vmatprep.subr.bf16.mxu0 0
  %281 = vmatpush1.bf16.msra.mxu0 0
  %282 = vmatprep.subr.bf16.mxu0 0
  %283 = vmatpush1.bf16.msra.mxu0 0
  %284 = vmatprep.subr.bf16.mxu0 0
  %285 = vmatpush1.bf16.msra.mxu0 0
  %286 = vmatprep.subr.bf16.mxu0 0
  %287 = vmatpush1.bf16.msra.mxu0 0
  %288 = vmatprep.subr.bf16.mxu0 0
  %289 = vmatpush1.bf16.msra.mxu0 0
  %290 = vmatprep.subr.bf16.mxu0 0
  %291 = vmatpush1.bf16.msra.mxu0 0
  %292 = vmatprep.mubr.bf16.mxu0 0
  %293 = vmatmul.mubr.bf16.gmra.mrb[0].mxu0 %v206
  %v294 = vpop.f32.mrb[0].mxu0
  %v295 = vadd.f32 %v246, %v294
  %v296 = vpop.f32.mrb[0].mxu0
  %v297 = vpop.f32.mrb[0].mxu0
  %v298 = vadd.f32 %v249, %v297
  %v299 = vpop.f32.mrb[0].mxu0
  %300 = vmatprep.mubr.bf16.mxu0 0
  %301 = vmatmul.mubr.bf16.gmra.mrb[0].mxu0 %v209
  %v302 = vpop.f32.mrb[0].mxu0
  %v303 = vadd.f32 %v254, %v302
  %v304 = vpop.f32.mrb[0].mxu0
  %v305 = vpop.f32.mrb[0].mxu0
  %v306 = vadd.f32 %v257, %v305
  %v307 = vpop.f32.mrb[0].mxu0
  %308 = vdwg.mxu0
  %v309 = vmax.f32 %v295, 0.0
  %v310 = vmax.f32 %v298, 0.0
  %v311 = vmax.f32 %v303, 0.0
  %v312 = vmax.f32 %v306, 0.0
  %313 = vst [vmem:[%s3] sm:$0xff] %v309
  %314 = vst [vmem:[%s3 + $0x8] sm:$0xff] %v310
  %315 = vst [vmem:[%s3 + $0x10] sm:$0xff] %v311
  %316 = vst [vmem:[%s3 + $0x18] sm:$0xff] %v312
  // Predicated region
  $region14: #{improved_compressor_forward.11} parent=0 // pred_check
    _
  $region15: #{improved_compressor_forward.11} parent=0 // pred_check_branch
    %318 = sbr.rel (0) target = $region17
  $region16: #{improved_compressor_forward.11} parent=0 // pred_region
    _
  $region17: #{improved_compressor_forward.11} parent=0 // pred_fallthru
    _
  // Predicated region
  $region18: #{improved_compressor_forward.11} parent=0 // pred_check
    _
  $region19: #{improved_compressor_forward.11} parent=0 // pred_check_branch
    %320 = sbr.rel (0) target = $region21
  $region20: #{improved_compressor_forward.11} parent=0 // pred_region
    _
  $region21: #{improved_compressor_forward.11} parent=0 // pred_fallthru
    _

// kernel: improved_compressor_forward.21
$region0: #{improved_compressor_forward.21}
  #allocation0 [shape = 'u32[]', space=smem, size = 0x4, offset = 0x4, fixed_abs, tag = 'smem constant byte address 0x4 - core index']
  #allocation1 [shape = 'u32[144,128]{1,0:T(1,128)}', space=vmem, size = 0x12000, scoped, tag = 'internal scratch']
  %s0 = inlined_call_operand.vmem [shape: bf16[512,288], index: 0, kind: input, shape index: {}]
  %s1 = inlined_call_operand.vmem [shape: bf16[288,128], index: 1, kind: input, shape index: {}]
  %s2 = inlined_call_operand.vmem [shape: f32[1,128], index: 2, kind: input, shape index: {}]
  %s3 = inlined_call_operand.hbm [shape: f32[512,128], index: 3, kind: output, shape index: {}]
  %s4 = sld [smem:[#allocation0]]
  $region22: #{improved_compressor_forward.21} parent=0
    _
  %s6 = ssub.s32 1, %s4
  %s7 = scalar_select 0, %s6, %s4
  $region1: #{improved_compressor_forward.21} parent=0
    #allocation2 [shape = 'u8[262144]{0}', space=vmem, size = 0x40000, scoped, tag = 'output window, operand 0, single buffered']
    #allocation3 [shape = 's32[1]{0}', space=sflag, size = 0x4, scoped, tag = 'scoped memory for improved_compressor_forward.21']
    %8 = vsyncpa [#allocation3], 0
    // Predicated region
    $region2: #{improved_compressor_forward.21} parent=1 // pred_check
      _
    $region3: #{improved_compressor_forward.21} parent=1 // pred_check_branch
      %10 = sbr.rel (0) target = $region5
    $region4: #{improved_compressor_forward.21} parent=1 // pred_region
      _
    $region5: #{improved_compressor_forward.21} parent=1 // pred_fallthru
      _
    // Predicated region
    $region6: #{improved_compressor_forward.21} parent=1 // pred_check
      _
    $region7: #{improved_compressor_forward.21} parent=1 // pred_check_branch
      %12 = sbr.rel (0) target = $region9
    $region8: #{improved_compressor_forward.21} parent=1 // pred_region
      _
    $region9: #{improved_compressor_forward.21} parent=1 // pred_fallthru
      _
    // Predicated region
    $region10: #{improved_compressor_forward.21} parent=1 // pred_check
      _
    $region11: #{improved_compressor_forward.21} parent=1 // pred_check_branch
      %14 = sbr.rel (0) target = $region13
    $region12: #{improved_compressor_forward.21} parent=1 // pred_region
      _
    $region13: #{improved_compressor_forward.21} parent=1 // pred_fallthru
      _
    %v16 = vld [vmem:[%s0] sm:$0xff]
    %v17 = vld [vmem:[%s0 + $0x8] sm:$0xf]
    %v18 = vld [vmem:[%s0 + $0xc] sm:$0xff]
    %v19 = vld [vmem:[%s0 + $0x14] sm:$0xf]
    %v20 = vld [vmem:[%s0 + $0x18] sm:$0xff]
    %v21 = vld [vmem:[%s0 + $0x20] sm:$0xf]
    %v22 = vld [vmem:[%s0 + $0x24] sm:$0xff]
    %v23 = vld [vmem:[%s0 + $0x2c] sm:$0xf]
    %v24 = vld [vmem:[%s0 + $0x30] sm:$0xff]
    %v25 = vld [vmem:[%s0 + $0x38] sm:$0xf]
    %v26 = vld [vmem:[%s0 + $0x3c] sm:$0xff]
    %v27 = vld [vmem:[%s0 + $0x44] sm:$0xf]
    %v28 = vld [vmem:[%s0 + $0x48] sm:$0xff]
    %v29 = vld [vmem:[%s0 + $0x50] sm:$0xf]
    %v30 = vld [vmem:[%s0 + $0x54] sm:$0xff]
    %v31 = vld [vmem:[%s0 + $0x5c] sm:$0xf]
    %v32 = vld [vmem:[%s0 + $0x60] sm:$0xff]
    %v33 = vld [vmem:[%s0 + $0x68] sm:$0xf]
    %v34 = vld [vmem:[%s0 + $0x6c] sm:$0xff]
    %v35 = vld [vmem:[%s0 + $0x74] sm:$0xf]
    %v36 = vld [vmem:[%s0 + $0x78] sm:$0xff]
    %v37 = vld [vmem:[%s0 + $0x80] sm:$0xf]
    %v38 = vld [vmem:[%s0 + $0x84] sm:$0xff]
    %v39 = vld [vmem:[%s0 + $0x8c] sm:$0xf]
    %v40 = vld [vmem:[%s0 + $0x90] sm:$0xff]
    %v41 = vld [vmem:[%s0 + $0x98] sm:$0xf]
    %v42 = vld [vmem:[%s0 + $0x9c] sm:$0xff]
    %v43 = vld [vmem:[%s0 + $0xa4] sm:$0xf]
    %v44 = vld [vmem:[%s0 + $0xa8] sm:$0xff]
    %v45 = vld [vmem:[%s0 + $0xb0] sm:$0xf]
    %v46 = vld [vmem:[%s0 + $0xb4] sm:$0xff]
    %v47 = vld [vmem:[%s0 + $0xbc] sm:$0xf]
    %v48 = vld [vmem:[%s0 + $0xc0] sm:$0xff]
    %v49 = vld [vmem:[%s0 + $0xc8] sm:$0xf]
    %v50 = vld [vmem:[%s0 + $0xcc] sm:$0xff]
    %v51 = vld [vmem:[%s0 + $0xd4] sm:$0xf]
    %v52 = vld [vmem:[%s0 + $0xd8] sm:$0xff]
    %v53 = vld [vmem:[%s0 + $0xe0] sm:$0xf]
    %v54 = vld [vmem:[%s0 + $0xe4] sm:$0xff]
    %v55 = vld [vmem:[%s0 + $0xec] sm:$0xf]
    %v56 = vld [vmem:[%s0 + $0xf0] sm:$0xff]
    %v57 = vld [vmem:[%s0 + $0xf8] sm:$0xf]
    %v58 = vld [vmem:[%s0 + $0xfc] sm:$0xff]
    %v59 = vld [vmem:[%s0 + $0x104] sm:$0xf]
    %v60 = vld [vmem:[%s0 + $0x108] sm:$0xff]
    %v61 = vld [vmem:[%s0 + $0x110] sm:$0xf]
    %v62 = vld [vmem:[%s0 + $0x114] sm:$0xff]
    %v63 = vld [vmem:[%s0 + $0x11c] sm:$0xf]
    %v64 = vld [vmem:[%s0 + $0x120] sm:$0xff]
    %v65 = vld [vmem:[%s0 + $0x128] sm:$0xf]
    %v66 = vld [vmem:[%s0 + $0x12c] sm:$0xff]
    %v67 = vld [vmem:[%s0 + $0x134] sm:$0xf]
    %v68 = vld [vmem:[%s0 + $0x138] sm:$0xff]
    %v69 = vld [vmem:[%s0 + $0x140] sm:$0xf]
    %v70 = vld [vmem:[%s0 + $0x144] sm:$0xff]
    %v71 = vld [vmem:[%s0 + $0x14c] sm:$0xf]
    %v72 = vld [vmem:[%s0 + $0x150] sm:$0xff]
    %v73 = vld [vmem:[%s0 + $0x158] sm:$0xf]
    %v74 = vld [vmem:[%s0 + $0x15c] sm:$0xff]
    %v75 = vld [vmem:[%s0 + $0x164] sm:$0xf]
    %v76 = vld [vmem:[%s0 + $0x168] sm:$0xff]
    %v77 = vld [vmem:[%s0 + $0x170] sm:$0xf]
    %v78 = vld [vmem:[%s0 + $0x174] sm:$0xff]
    %v79 = vld [vmem:[%s0 + $0x17c] sm:$0xf]
    %v80 = vld [vmem:[%s0 + $0x180] sm:$0xff]
    %v81 = vld [vmem:[%s0 + $0x188] sm:$0xf]
    %v82 = vld [vmem:[%s0 + $0x18c] sm:$0xff]
    %v83 = vld [vmem:[%s0 + $0x194] sm:$0xf]
    %v84 = vld [vmem:[%s0 + $0x198] sm:$0xff]
    %v85 = vld [vmem:[%s0 + $0x1a0] sm:$0xf]
    %v86 = vld [vmem:[%s0 + $0x1a4] sm:$0xff]
    %v87 = vld [vmem:[%s0 + $0x1ac] sm:$0xf]
    %v88 = vld [vmem:[%s0 + $0x1b0] sm:$0xff]
    %v89 = vld [vmem:[%s0 + $0x1b8] sm:$0xf]
    %v90 = vld [vmem:[%s0 + $0x1bc] sm:$0xff]
    %v91 = vld [vmem:[%s0 + $0x1c4] sm:$0xf]
    %v92 = vld [vmem:[%s0 + $0x1c8] sm:$0xff]
    %v93 = vld [vmem:[%s0 + $0x1d0] sm:$0xf]
    %v94 = vld [vmem:[%s0 + $0x1d4] sm:$0xff]
    %v95 = vld [vmem:[%s0 + $0x1dc] sm:$0xf]
    %v96 = vld [vmem:[%s0 + $0x1e0] sm:$0xff]
    %v97 = vld [vmem:[%s0 + $0x1e8] sm:$0xf]
    %v98 = vld [vmem:[%s0 + $0x1ec] sm:$0xff]
    %v99 = vld [vmem:[%s0 + $0x1f4] sm:$0xf]
    %v100 = vld [vmem:[%s0 + $0x1f8] sm:$0xff]
    %v101 = vld [vmem:[%s0 + $0x200] sm:$0xf]
    %v102 = vld [vmem:[%s0 + $0x204] sm:$0xff]
    %v103 = vld [vmem:[%s0 + $0x20c] sm:$0xf]
    %v104 = vld [vmem:[%s0 + $0x210] sm:$0xff]
    %v105 = vld [vmem:[%s0 + $0x218] sm:$0xf]
    %v106 = vld [vmem:[%s0 + $0x21c] sm:$0xff]
    %v107 = vld [vmem:[%s0 + $0x224] sm:$0xf]
    %v108 = vld [vmem:[%s0 + $0x228] sm:$0xff]
    %v109 = vld [vmem:[%s0 + $0x230] sm:$0xf]
    %v110 = vld [vmem:[%s0 + $0x234] sm:$0xff]
    %v111 = vld [vmem:[%s0 + $0x23c] sm:$0xf]
    %v112 = vld [vmem:[%s0 + $0x240] sm:$0xff]
    %v113 = vld [vmem:[%s0 + $0x248] sm:$0xf]
    %v114 = vld [vmem:[%s0 + $0x24c] sm:$0xff]
    %v115 = vld [vmem:[%s0 + $0x254] sm:$0xf]
    %v116 = vld [vmem:[%s0 + $0x258] sm:$0xff]
    %v117 = vld [vmem:[%s0 + $0x260] sm:$0xf]
    %v118 = vld [vmem:[%s0 + $0x264] sm:$0xff]
    %v119 = vld [vmem:[%s0 + $0x26c] sm:$0xf]
    %v120 = vld [vmem:[%s0 + $0x270] sm:$0xff]
    %v121 = vld [vmem:[%s0 + $0x278] sm:$0xf]
    %v122 = vld [vmem:[%s0 + $0x27c] sm:$0xff]
    %v123 = vld [vmem:[%s0 + $0x284] sm:$0xf]
    %v124 = vld [vmem:[%s0 + $0x288] sm:$0xff]
    %v125 = vld [vmem:[%s0 + $0x290] sm:$0xf]
    %v126 = vld [vmem:[%s0 + $0x294] sm:$0xff]
    %v127 = vld [vmem:[%s0 + $0x29c] sm:$0xf]
    %v128 = vld [vmem:[%s0 + $0x2a0] sm:$0xff]
    %v129 = vld [vmem:[%s0 + $0x2a8] sm:$0xf]
    %v130 = vld [vmem:[%s0 + $0x2ac] sm:$0xff]
    %v131 = vld [vmem:[%s0 + $0x2b4] sm:$0xf]
    %v132 = vld [vmem:[%s0 + $0x2b8] sm:$0xff]
    %v133 = vld [vmem:[%s0 + $0x2c0] sm:$0xf]
    %v134 = vld [vmem:[%s0 + $0x2c4] sm:$0xff]
    %v135 = vld [vmem:[%s0 + $0x2cc] sm:$0xf]
    %v136 = vld [vmem:[%s0 + $0x2d0] sm:$0xff]
    %v137 = vld [vmem:[%s0 + $0x2d8] sm:$0xf]
    %v138 = vld [vmem:[%s0 + $0x2dc] sm:$0xff]
    %v139 = vld [vmem:[%s0 + $0x2e4] sm:$0xf]
    %v140 = vld [vmem:[%s0 + $0x2e8] sm:$0xff]
    %v141 = vld [vmem:[%s0 + $0x2f0] sm:$0xf]
    %v142 = vld [vmem:[%s0 + $0x2f4] sm:$0xff]
    %v143 = vld [vmem:[%s0 + $0x2fc] sm:$0xf]
    %v144 = vld [vmem:[%s1] sm:$0xf]
    %v145 = vld [vmem:[%s1 + $0x4] sm:$0xf]
    %v146 = vld [vmem:[%s1 + $0x8] sm:$0xf]
    %v147 = vld [vmem:[%s1 + $0xc] sm:$0xf]
    %v148 = vld [vmem:[%s1 + $0x10] sm:$0xf]
    %v149 = vld [vmem:[%s1 + $0x14] sm:$0xf]
    %v150 = vld [vmem:[%s1 + $0x18] sm:$0xf]
    %v151 = vld [vmem:[%s1 + $0x1c] sm:$0xf]
    %v152 = vld [vmem:[%s1 + $0x20] sm:$0xf]
    %v153 = vld [vmem:[%s1 + $0x24] sm:$0xf]
    %v154 = vld [vmem:[%s1 + $0x28] sm:$0xf]
    %v155 = vld [vmem:[%s1 + $0x2c] sm:$0xf]
    %v156 = vld [vmem:[%s1 + $0x30] sm:$0xf]
    %v157 = vld [vmem:[%s1 + $0x34] sm:$0xf]
    %v158 = vld [vmem:[%s1 + $0x38] sm:$0xf]
    %v159 = vld [vmem:[%s1 + $0x3c] sm:$0xf]
    %v160 = vld [vmem:[%s1 + $0x40] sm:$0xf]
    %v161 = vld [vmem:[%s1 + $0x44] sm:$0xf]
    %v162 = vld [vmem:[%s1 + $0x48] sm:$0xf]
    %v163 = vld [vmem:[%s1 + $0x4c] sm:$0xf]
    %v164 = vld [vmem:[%s1 + $0x50] sm:$0xf]
    %v165 = vld [vmem:[%s1 + $0x54] sm:$0xf]
    %v166 = vld [vmem:[%s1 + $0x58] sm:$0xf]
    %v167 = vld [vmem:[%s1 + $0x5c] sm:$0xf]
    %v168 = vld [vmem:[%s1 + $0x60] sm:$0xf]
    %v169 = vld [vmem:[%s1 + $0x64] sm:$0xf]
    %v170 = vld [vmem:[%s1 + $0x68] sm:$0xf]
    %v171 = vld [vmem:[%s1 + $0x6c] sm:$0xf]
    %v172 = vld [vmem:[%s1 + $0x70] sm:$0xf]
    %v173 = vld [vmem:[%s1 + $0x74] sm:$0xf]
    %v174 = vld [vmem:[%s1 + $0x78] sm:$0xf]
    %v175 = vld [vmem:[%s1 + $0x7c] sm:$0xf]
    %v176 = vld [vmem:[%s1 + $0x80] sm:$0xf]
    %v177 = vld [vmem:[%s1 + $0x84] sm:$0xf]
    %v178 = vld [vmem:[%s1 + $0x88] sm:$0xf]
    %v179 = vld [vmem:[%s1 + $0x8c] sm:$0xf]
    %v180 = vld [vmem:[%s2] sm:$0x1]
    %v182 = vlaneseq
    %v183 = vshrl.u32 %v182, 7
    %v184 = vsub.s32 0, %v183
    %v185 = vrot.slane %v180, %v184
    %v315 = vunpack.c.l.b16 %v16
    %v316 = vunpack.c.h.b16 %v16
    %v317 = vunpack.c.l.b16 %v17
    %v318 = vunpack.c.l.b16 %v18
    %v319 = vunpack.c.h.b16 %v18
    %v320 = vunpack.c.l.b16 %v19
    %v321 = vunpack.c.l.b16 %v20
    %v322 = vunpack.c.h.b16 %v20
    %v323 = vunpack.c.l.b16 %v21
    %v324 = vunpack.c.l.b16 %v22
    %v325 = vunpack.c.h.b16 %v22
    %v326 = vunpack.c.l.b16 %v23
    %v327 = vunpack.c.l.b16 %v24
    %v328 = vunpack.c.h.b16 %v24
    %v329 = vunpack.c.l.b16 %v25
    %v330 = vunpack.c.l.b16 %v26
    %v331 = vunpack.c.h.b16 %v26
    %v332 = vunpack.c.l.b16 %v27
    %v333 = vunpack.c.l.b16 %v28
    %v334 = vunpack.c.h.b16 %v28
    %v335 = vunpack.c.l.b16 %v29
    %v336 = vunpack.c.l.b16 %v30
    %v337 = vunpack.c.h.b16 %v30
    %v338 = vunpack.c.l.b16 %v31
    %v339 = vunpack.c.l.b16 %v32
    %v340 = vunpack.c.h.b16 %v32
    %v341 = vunpack.c.l.b16 %v33
    %v342 = vunpack.c.l.b16 %v34
    %v343 = vunpack.c.h.b16 %v34
    %v344 = vunpack.c.l.b16 %v35
    %v345 = vunpack.c.l.b16 %v36
    %v346 = vunpack.c.h.b16 %v36
    %v347 = vunpack.c.l.b16 %v37
    %v348 = vunpack.c.l.b16 %v38
    %v349 = vunpack.c.h.b16 %v38
    %v350 = vunpack.c.l.b16 %v39
    %v351 = vunpack.c.l.b16 %v40
    %v352 = vunpack.c.h.b16 %v40
    %v353 = vunpack.c.l.b16 %v41
    %v354 = vunpack.c.l.b16 %v42
    %v355 = vunpack.c.h.b16 %v42
    %v356 = vunpack.c.l.b16 %v43
    %v357 = vunpack.c.l.b16 %v44
    %v358 = vunpack.c.h.b16 %v44
    %v359 = vunpack.c.l.b16 %v45
    %v360 = vunpack.c.l.b16 %v46
    %v361 = vunpack.c.h.b16 %v46
    %v362 = vunpack.c.l.b16 %v47
    %v363 = vunpack.c.l.b16 %v48
    %v364 = vunpack.c.h.b16 %v48
    %v365 = vunpack.c.l.b16 %v49
    %v366 = vunpack.c.l.b16 %v50
    %v367 = vunpack.c.h.b16 %v50
    %v368 = vunpack.c.l.b16 %v51
    %v369 = vunpack.c.l.b16 %v52
    %v370 = vunpack.c.h.b16 %v52
    %v371 = vunpack.c.l.b16 %v53
    %v372 = vunpack.c.l.b16 %v54
    %v373 = vunpack.c.h.b16 %v54
    %v374 = vunpack.c.l.b16 %v55
    %v375 = vunpack.c.l.b16 %v56
    %v376 = vunpack.c.h.b16 %v56
    %v377 = vunpack.c.l.b16 %v57
    %v378 = vunpack.c.l.b16 %v58
    %v379 = vunpack.c.h.b16 %v58
    %v380 = vunpack.c.l.b16 %v59
    %v381 = vunpack.c.l.b16 %v60
    %v382 = vunpack.c.h.b16 %v60
    %v383 = vunpack.c.l.b16 %v61
    %v384 = vunpack.c.l.b16 %v62
    %v385 = vunpack.c.h.b16 %v62
    %v386 = vunpack.c.l.b16 %v63
    %v387 = vunpack.c.l.b16 %v64
    %v388 = vunpack.c.h.b16 %v64
    %v389 = vunpack.c.l.b16 %v65
    %v390 = vunpack.c.l.b16 %v66
    %v391 = vunpack.c.h.b16 %v66
    %v392 = vunpack.c.l.b16 %v67
    %v393 = vunpack.c.l.b16 %v68
    %v394 = vunpack.c.h.b16 %v68
    %v395 = vunpack.c.l.b16 %v69
    %v396 = vunpack.c.l.b16 %v70
    %v397 = vunpack.c.h.b16 %v70
    %v398 = vunpack.c.l.b16 %v71
    %v399 = vunpack.c.l.b16 %v72
    %v400 = vunpack.c.h.b16 %v72
    %v401 = vunpack.c.l.b16 %v73
    %v402 = vunpack.c.l.b16 %v74
    %v403 = vunpack.c.h.b16 %v74
    %v404 = vunpack.c.l.b16 %v75
    %v405 = vunpack.c.l.b16 %v76
    %v406 = vunpack.c.h.b16 %v76
    %v407 = vunpack.c.l.b16 %v77
    %v408 = vunpack.c.l.b16 %v78
    %v409 = vunpack.c.h.b16 %v78
    %v410 = vunpack.c.l.b16 %v79
    %v411 = vunpack.c.l.b16 %v80
    %v412 = vunpack.c.h.b16 %v80
    %v413 = vunpack.c.l.b16 %v81
    %v414 = vunpack.c.l.b16 %v82
    %v415 = vunpack.c.h.b16 %v82
    %v416 = vunpack.c.l.b16 %v83
    %v417 = vunpack.c.l.b16 %v84
    %v418 = vunpack.c.h.b16 %v84
    %v419 = vunpack.c.l.b16 %v85
    %v420 = vunpack.c.l.b16 %v86
    %v421 = vunpack.c.h.b16 %v86
    %v422 = vunpack.c.l.b16 %v87
    %v423 = vunpack.c.l.b16 %v88
    %v424 = vunpack.c.h.b16 %v88
    %v425 = vunpack.c.l.b16 %v89
    %v426 = vunpack.c.l.b16 %v90
    %v427 = vunpack.c.h.b16 %v90
    %v428 = vunpack.c.l.b16 %v91
    %v429 = vunpack.c.l.b16 %v92
    %v430 = vunpack.c.h.b16 %v92
    %v431 = vunpack.c.l.b16 %v93
    %v432 = vunpack.c.l.b16 %v94
    %v433 = vunpack.c.h.b16 %v94
    %v434 = vunpack.c.l.b16 %v95
    %v435 = vunpack.c.l.b16 %v96
    %v436 = vunpack.c.h.b16 %v96
    %v437 = vunpack.c.l.b16 %v97
    %v438 = vunpack.c.l.b16 %v98
    %v439 = vunpack.c.h.b16 %v98
    %v440 = vunpack.c.l.b16 %v99
    %v441 = vunpack.c.l.b16 %v100
    %v442 = vunpack.c.h.b16 %v100
    %v443 = vunpack.c.l.b16 %v101
    %v444 = vunpack.c.l.b16 %v102
    %v445 = vunpack.c.h.b16 %v102
    %v446 = vunpack.c.l.b16 %v103
    %v447 = vunpack.c.l.b16 %v104
    %v448 = vunpack.c.h.b16 %v104
    %v449 = vunpack.c.l.b16 %v105
    %v450 = vunpack.c.l.b16 %v106
    %v451 = vunpack.c.h.b16 %v106
    %v452 = vunpack.c.l.b16 %v107
    %v453 = vunpack.c.l.b16 %v108
    %v454 = vunpack.c.h.b16 %v108
    %v455 = vunpack.c.l.b16 %v109
    %v456 = vunpack.c.l.b16 %v110
    %v457 = vunpack.c.h.b16 %v110
    %v458 = vunpack.c.l.b16 %v111
    %v459 = vunpack.c.l.b16 %v112
    %v460 = vunpack.c.h.b16 %v112
    %v461 = vunpack.c.l.b16 %v113
    %v462 = vunpack.c.l.b16 %v114
    %v463 = vunpack.c.h.b16 %v114
    %v464 = vunpack.c.l.b16 %v115
    %v465 = vunpack.c.l.b16 %v116
    %v466 = vunpack.c.h.b16 %v116
    %v467 = vunpack.c.l.b16 %v117
    %v468 = vunpack.c.l.b16 %v118
    %v469 = vunpack.c.h.b16 %v118
    %v470 = vunpack.c.l.b16 %v119
    %v471 = vunpack.c.l.b16 %v120
    %v472 = vunpack.c.h.b16 %v120
    %v473 = vunpack.c.l.b16 %v121
    %v474 = vunpack.c.l.b16 %v122
    %v475 = vunpack.c.h.b16 %v122
    %v476 = vunpack.c.l.b16 %v123
    %v477 = vunpack.c.l.b16 %v124
    %v478 = vunpack.c.h.b16 %v124
    %v479 = vunpack.c.l.b16 %v125
    %v480 = vunpack.c.l.b16 %v126
    %v481 = vunpack.c.h.b16 %v126
    %v482 = vunpack.c.l.b16 %v127
    %v483 = vunpack.c.l.b16 %v128
    %v484 = vunpack.c.h.b16 %v128
    %v485 = vunpack.c.l.b16 %v129
    %v486 = vunpack.c.l.b16 %v130
    %v487 = vunpack.c.h.b16 %v130
    %v488 = vunpack.c.l.b16 %v131
    %v489 = vunpack.c.l.b16 %v132
    %v490 = vunpack.c.h.b16 %v132
    %v491 = vunpack.c.l.b16 %v133
    %v492 = vunpack.c.l.b16 %v134
    %v493 = vunpack.c.h.b16 %v134
    %v494 = vunpack.c.l.b16 %v135
    %v495 = vunpack.c.l.b16 %v136
    %v496 = vunpack.c.h.b16 %v136
    %v497 = vunpack.c.l.b16 %v137
    %v498 = vunpack.c.l.b16 %v138
    %v499 = vunpack.c.h.b16 %v138
    %v500 = vunpack.c.l.b16 %v139
    %v501 = vunpack.c.l.b16 %v140
    %v502 = vunpack.c.h.b16 %v140
    %v503 = vunpack.c.l.b16 %v141
    %v504 = vunpack.c.l.b16 %v142
    %v505 = vunpack.c.h.b16 %v142
    %v506 = vunpack.c.l.b16 %v143
    %v507 = vpack.c.b16 %v318, %v315
    %v508 = vpack.c.b16 %v319, %v316
    %v509 = vpack.c.b16 %v320, %v317
    %v510 = vpack.c.b16 %v324, %v321
    %v511 = vpack.c.b16 %v325, %v322
    %v512 = vpack.c.b16 %v326, %v323
    %v513 = vpack.c.b16 %v330, %v327
    %v514 = vpack.c.b16 %v331, %v328
    %v515 = vpack.c.b16 %v332, %v329
    %v516 = vpack.c.b16 %v336, %v333
    %v517 = vpack.c.b16 %v337, %v334
    %v518 = vpack.c.b16 %v338, %v335
    %v519 = vpack.c.b16 %v342, %v339
    %v520 = vpack.c.b16 %v343, %v340
    %v521 = vpack.c.b16 %v344, %v341
    %v522 = vpack.c.b16 %v348, %v345
    %v523 = vpack.c.b16 %v349, %v346
    %v524 = vpack.c.b16 %v350, %v347
    %v525 = vpack.c.b16 %v354, %v351
    %v526 = vpack.c.b16 %v355, %v352
    %v527 = vpack.c.b16 %v356, %v353
    %v528 = vpack.c.b16 %v360, %v357
    %v529 = vpack.c.b16 %v361, %v358
    %v530 = vpack.c.b16 %v362, %v359
    %v531 = vpack.c.b16 %v366, %v363
    %v532 = vpack.c.b16 %v367, %v364
    %v533 = vpack.c.b16 %v368, %v365
    %v534 = vpack.c.b16 %v372, %v369
    %v535 = vpack.c.b16 %v373, %v370
    %v536 = vpack.c.b16 %v374, %v371
    %v537 = vpack.c.b16 %v378, %v375
    %v538 = vpack.c.b16 %v379, %v376
    %v539 = vpack.c.b16 %v380, %v377
    %v540 = vpack.c.b16 %v384, %v381
    %v541 = vpack.c.b16 %v385, %v382
    %v542 = vpack.c.b16 %v386, %v383
    %v543 = vpack.c.b16 %v390, %v387
    %v544 = vpack.c.b16 %v391, %v388
    %v545 = vpack.c.b16 %v392, %v389
    %v546 = vpack.c.b16 %v396, %v393
    %v547 = vpack.c.b16 %v397, %v394
    %v548 = vpack.c.b16 %v398, %v395
    %v549 = vpack.c.b16 %v402, %v399
    %v550 = vpack.c.b16 %v403, %v400
    %v551 = vpack.c.b16 %v404, %v401
    %v552 = vpack.c.b16 %v408, %v405
    %v553 = vpack.c.b16 %v409, %v406
    %v554 = vpack.c.b16 %v410, %v407
    %v555 = vpack.c.b16 %v414, %v411
    %v556 = vpack.c.b16 %v415, %v412
    %v557 = vpack.c.b16 %v416, %v413
    %v558 = vpack.c.b16 %v420, %v417
    %v559 = vpack.c.b16 %v421, %v418
    %v560 = vpack.c.b16 %v422, %v419
    %v561 = vpack.c.b16 %v426, %v423
    %v562 = vpack.c.b16 %v427, %v424
    %v563 = vpack.c.b16 %v428, %v425
    %v564 = vpack.c.b16 %v432, %v429
    %v565 = vpack.c.b16 %v433, %v430
    %v566 = vpack.c.b16 %v434, %v431
    %v567 = vpack.c.b16 %v438, %v435
    %v568 = vpack.c.b16 %v439, %v436
    %v569 = vpack.c.b16 %v440, %v437
    %v570 = vpack.c.b16 %v444, %v441
    %v571 = vpack.c.b16 %v445, %v442
    %v572 = vpack.c.b16 %v446, %v443
    %v573 = vpack.c.b16 %v450, %v447
    %v574 = vpack.c.b16 %v451, %v448
    %v575 = vpack.c.b16 %v452, %v449
    %v576 = vpack.c.b16 %v456, %v453
    %v577 = vpack.c.b16 %v457, %v454
    %v578 = vpack.c.b16 %v458, %v455
    %v579 = vpack.c.b16 %v462, %v459
    %v580 = vpack.c.b16 %v463, %v460
    %v581 = vpack.c.b16 %v464, %v461
    %v582 = vpack.c.b16 %v468, %v465
    %v583 = vpack.c.b16 %v469, %v466
    %v584 = vpack.c.b16 %v470, %v467
    %v585 = vpack.c.b16 %v474, %v471
    %v586 = vpack.c.b16 %v475, %v472
    %v587 = vpack.c.b16 %v476, %v473
    %v588 = vpack.c.b16 %v480, %v477
    %v589 = vpack.c.b16 %v481, %v478
    %v590 = vpack.c.b16 %v482, %v479
    %v591 = vpack.c.b16 %v486, %v483
    %v592 = vpack.c.b16 %v487, %v484
    %v593 = vpack.c.b16 %v488, %v485
    %v594 = vpack.c.b16 %v492, %v489
    %v595 = vpack.c.b16 %v493, %v490
    %v596 = vpack.c.b16 %v494, %v491
    %v597 = vpack.c.b16 %v498, %v495
    %v598 = vpack.c.b16 %v499, %v496
    %v599 = vpack.c.b16 %v500, %v497
    %v600 = vpack.c.b16 %v504, %v501
    %v601 = vpack.c.b16 %v505, %v502
    %v602 = vpack.c.b16 %v506, %v503
    %v703 = vunpack.c.l.b16 %v144
    %v704 = vunpack.c.l.b16 %v145
    %v705 = vunpack.c.l.b16 %v146
    %v706 = vunpack.c.l.b16 %v147
    %v707 = vunpack.c.l.b16 %v148
    %v708 = vunpack.c.l.b16 %v149
    %v709 = vunpack.c.l.b16 %v150
    %v710 = vunpack.c.l.b16 %v151
    %v711 = vunpack.c.l.b16 %v152
    %v712 = vunpack.c.l.b16 %v153
    %v713 = vunpack.c.l.b16 %v154
    %v714 = vunpack.c.l.b16 %v155
    %v715 = vunpack.c.l.b16 %v156
    %v716 = vunpack.c.l.b16 %v157
    %v717 = vunpack.c.l.b16 %v158
    %v718 = vunpack.c.l.b16 %v159
    %v719 = vunpack.c.l.b16 %v160
    %v720 = vunpack.c.l.b16 %v161
    %v721 = vunpack.c.l.b16 %v162
    %v722 = vunpack.c.l.b16 %v163
    %v723 = vunpack.c.l.b16 %v164
    %v724 = vunpack.c.l.b16 %v165
    %v725 = vunpack.c.l.b16 %v166
    %v726 = vunpack.c.l.b16 %v167
    %v727 = vunpack.c.l.b16 %v168
    %v728 = vunpack.c.l.b16 %v169
    %v729 = vunpack.c.l.b16 %v170
    %v730 = vunpack.c.l.b16 %v171
    %v731 = vunpack.c.l.b16 %v172
    %v732 = vunpack.c.l.b16 %v173
    %v733 = vunpack.c.l.b16 %v174
    %v734 = vunpack.c.l.b16 %v175
    %v735 = vunpack.c.l.b16 %v176
    %v736 = vunpack.c.l.b16 %v177
    %v737 = vunpack.c.l.b16 %v178
    %v738 = vunpack.c.l.b16 %v179
    %v739 = vpack.c.b16 %v704, %v703
    %v740 = vpack.c.b16 %v706, %v705
    %v741 = vpack.c.b16 %v708, %v707
    %v742 = vpack.c.b16 %v710, %v709
    %v743 = vpack.c.b16 %v712, %v711
    %v744 = vpack.c.b16 %v714, %v713
    %v745 = vpack.c.b16 %v716, %v715
    %v746 = vpack.c.b16 %v718, %v717
    %v747 = vpack.c.b16 %v720, %v719
    %v748 = vpack.c.b16 %v722, %v721
    %v749 = vpack.c.b16 %v724, %v723
    %v750 = vpack.c.b16 %v726, %v725
    %v751 = vpack.c.b16 %v728, %v727
    %v752 = vpack.c.b16 %v730, %v729
    %v753 = vpack.c.b16 %v732, %v731
    %v754 = vpack.c.b16 %v734, %v733
    %v755 = vpack.c.b16 %v736, %v735
    %v756 = vpack.c.b16 %v738, %v737
    %vm775 = vcmask 261120
    %v777 = vsel %vm775, %v509, 0
    %v780 = vsel %vm775, %v512, 0
    %v783 = vsel %vm775, %v515, 0
    %v786 = vsel %vm775, %v518, 0
    %v789 = vsel %vm775, %v521, 0
    %v792 = vsel %vm775, %v524, 0
    %v795 = vsel %vm775, %v527, 0
    %v798 = vsel %vm775, %v530, 0
    %v801 = vsel %vm775, %v533, 0
    %v804 = vsel %vm775, %v536, 0
    %v807 = vsel %vm775, %v539, 0
    %v810 = vsel %vm775, %v542, 0
    %v813 = vsel %vm775, %v545, 0
    %v816 = vsel %vm775, %v548, 0
    %v819 = vsel %vm775, %v551, 0
    %v822 = vsel %vm775, %v554, 0
    %v825 = vsel %vm775, %v557, 0
    %v828 = vsel %vm775, %v560, 0
    %v831 = vsel %vm775, %v563, 0
    %v834 = vsel %vm775, %v566, 0
    %v837 = vsel %vm775, %v569, 0
    %v840 = vsel %vm775, %v572, 0
    %v843 = vsel %vm775, %v575, 0
    %v846 = vsel %vm775, %v578, 0
    %v849 = vsel %vm775, %v581, 0
    %v852 = vsel %vm775, %v584, 0
    %v855 = vsel %vm775, %v587, 0
    %v858 = vsel %vm775, %v590, 0
    %v861 = vsel %vm775, %v593, 0
    %v864 = vsel %vm775, %v596, 0
    %v867 = vsel %vm775, %v599, 0
    %v870 = vsel %vm775, %v602, 0
    %872 = vmatprep.subr.bf16.mxu0 0
    %873 = vmatpush1.bf16.msra.mxu0 %v739
    %874 = vmatprep.subr.bf16.mxu0 0
    %875 = vmatpush1.bf16.msra.mxu0 %v740
    %876 = vmatprep.subr.bf16.mxu0 0
    %877 = vmatpush1.bf16.msra.mxu0 %v741
    %878 = vmatprep.subr.bf16.mxu0 0
    %879 = vmatpush1.bf16.msra.mxu0 %v742
    %880 = vmatprep.subr.bf16.mxu0 0
    %881 = vmatpush1.bf16.msra.mxu0 %v743
    %882 = vmatprep.subr.bf16.mxu0 0
    %883 = vmatpush1.bf16.msra.mxu0 %v744
    %884 = vmatprep.subr.bf16.mxu0 0
    %885 = vmatpush1.bf16.msra.mxu0 %v745
    %886 = vmatprep.subr.bf16.mxu0 0
    %887 = vmatpush1.bf16.msra.mxu0 %v746
    %888 = vmatprep.subr.bf16.mxu0 0
    %889 = vmatpush1.bf16.msra.mxu0 %v747
    %890 = vmatprep.subr.bf16.mxu0 0
    %891 = vmatpush1.bf16.msra.mxu0 %v748
    %892 = vmatprep.subr.bf16.mxu0 0
    %893 = vmatpush1.bf16.msra.mxu0 %v749
    %894 = vmatprep.subr.bf16.mxu0 0
    %895 = vmatpush1.bf16.msra.mxu0 %v750
    %896 = vmatprep.subr.bf16.mxu0 0
    %897 = vmatpush1.bf16.msra.mxu0 %v751
    %898 = vmatprep.subr.bf16.mxu0 0
    %899 = vmatpush1.bf16.msra.mxu0 %v752
    %900 = vmatprep.subr.bf16.mxu0 0
    %901 = vmatpush1.bf16.msra.mxu0 %v753
    %902 = vmatprep.subr.bf16.mxu0 0
    %903 = vmatpush1.bf16.msra.mxu0 %v754
    %904 = vmatprep.mubr.bf16.mxu0 %v508
    %905 = vmatmul.mubr.bf16.gmra.mrb[0].mxu0 %v507
    %v906 = vpop.f32.mrb[0].mxu0
    %v907 = vadd.f32 %v185, %v906
    %v908 = vpop.f32.mrb[0].mxu0
    %v909 = vpop.f32.mrb[0].mxu0
    %v910 = vadd.f32 %v185, %v909
    %v911 = vpop.f32.mrb[0].mxu0
    %912 = vmatprep.mubr.bf16.mxu0 %v511
    %913 = vmatmul.mubr.bf16.gmra.mrb[0].mxu0 %v510
    %v914 = vpop.f32.mrb[0].mxu0
    %v915 = vadd.f32 %v185, %v914
    %v916 = vpop.f32.mrb[0].mxu0
    %v917 = vpop.f32.mrb[0].mxu0
    %v918 = vadd.f32 %v185, %v917
    %v919 = vpop.f32.mrb[0].mxu0
    %920 = vmatprep.mubr.bf16.mxu0 %v514
    %921 = vmatmul.mubr.bf16.gmra.mrb[0].mxu0 %v513
    %v922 = vpop.f32.mrb[0].mxu0
    %v923 = vadd.f32 %v185, %v922
    %v924 = vpop.f32.mrb[0].mxu0
    %v925 = vpop.f32.mrb[0].mxu0
    %v926 = vadd.f32 %v185, %v925
    %v927 = vpop.f32.mrb[0].mxu0
    %928 = vmatprep.mubr.bf16.mxu0 %v517
    %929 = vmatmul.mubr.bf16.gmra.mrb[0].mxu0 %v516
    %v930 = vpop.f32.mrb[0].mxu0
    %v931 = vadd.f32 %v185, %v930
    %v932 = vpop.f32.mrb[0].mxu0
    %v933 = vpop.f32.mrb[0].mxu0
    %v934 = vadd.f32 %v185, %v933
    %v935 = vpop.f32.mrb[0].mxu0
    %936 = vmatprep.mubr.bf16.mxu0 %v520
    %937 = vmatmul.mubr.bf16.gmra.mrb[0].mxu0 %v519
    %v938 = vpop.f32.mrb[0].mxu0
    %v939 = vadd.f32 %v185, %v938
    %v940 = vpop.f32.mrb[0].mxu0
    %v941 = vpop.f32.mrb[0].mxu0
    %v942 = vadd.f32 %v185, %v941
    %v943 = vpop.f32.mrb[0].mxu0
    %944 = vmatprep.mubr.bf16.mxu0 %v523
    %945 = vmatmul.mubr.bf16.gmra.mrb[0].mxu0 %v522
    %v946 = vpop.f32.mrb[0].mxu0
    %v947 = vadd.f32 %v185, %v946
    %v948 = vpop.f32.mrb[0].mxu0
    %v949 = vpop.f32.mrb[0].mxu0
    %v950 = vadd.f32 %v185, %v949
    %v951 = vpop.f32.mrb[0].mxu0
    %952 = vmatprep.mubr.bf16.mxu0 %v526
    %953 = vmatmul.mubr.bf16.gmra.mrb[0].mxu0 %v525
    %v954 = vpop.f32.mrb[0].mxu0
    %v955 = vadd.f32 %v185, %v954
    %v956 = vpop.f32.mrb[0].mxu0
    %v957 = vpop.f32.mrb[0].mxu0
    %v958 = vadd.f32 %v185, %v957
    %v959 = vpop.f32.mrb[0].mxu0
    %960 = vmatprep.mubr.bf16.mxu0 %v529
    %961 = vmatmul.mubr.bf16.gmra.mrb[0].mxu0 %v528
    %v962 = vpop.f32.mrb[0].mxu0
    %v963 = vadd.f32 %v185, %v962
    %v964 = vpop.f32.mrb[0].mxu0
    %v965 = vpop.f32.mrb[0].mxu0
    %v966 = vadd.f32 %v185, %v965
    %v967 = vpop.f32.mrb[0].mxu0
    %968 = vmatprep.mubr.bf16.mxu0 %v532
    %969 = vmatmul.mubr.bf16.gmra.mrb[0].mxu0 %v531
    %v970 = vpop.f32.mrb[0].mxu0
    %v971 = vadd.f32 %v185, %v970
    %v972 = vpop.f32.mrb[0].mxu0
    %v973 = vpop.f32.mrb[0].mxu0
    %v974 = vadd.f32 %v185, %v973
    %v975 = vpop.f32.mrb[0].mxu0
    %976 = vmatprep.mubr.bf16.mxu0 %v535
    %977 = vmatmul.mubr.bf16.gmra.mrb[0].mxu0 %v534
    %v978 = vpop.f32.mrb[0].mxu0
    %v979 = vadd.f32 %v185, %v978
    %v980 = vpop.f32.mrb[0].mxu0
    %v981 = vpop.f32.mrb[0].mxu0
    %v982 = vadd.f32 %v185, %v981
    %v983 = vpop.f32.mrb[0].mxu0
    %984 = vmatprep.mubr.bf16.mxu0 %v538
    %985 = vmatmul.mubr.bf16.gmra.mrb[0].mxu0 %v537
    %v986 = vpop.f32.mrb[0].mxu0
    %v987 = vadd.f32 %v185, %v986
    %v988 = vpop.f32.mrb[0].mxu0
    %v989 = vpop.f32.mrb[0].mxu0
    %v990 = vadd.f32 %v185, %v989
    %v991 = vpop.f32.mrb[0].mxu0
    %992 = vmatprep.mubr.bf16.mxu0 %v541
    %993 = vmatmul.mubr.bf16.gmra.mrb[0].mxu0 %v540
    %v994 = vpop.f32.mrb[0].mxu0
    %v995 = vadd.f32 %v185, %v994
    %v996 = vpop.f32.mrb[0].mxu0
    %v997 = vpop.f32.mrb[0].mxu0
    %v998 = vadd.f32 %v185, %v997
    %v999 = vpop.f32.mrb[0].mxu0
    %1000 = vmatprep.mubr.bf16.mxu0 %v544
    %1001 = vmatmul.mubr.bf16.gmra.mrb[0].mxu0 %v543
    %v1002 = vpop.f32.mrb[0].mxu0
    %v1003 = vadd.f32 %v185, %v1002
    %v1004 = vpop.f32.mrb[0].mxu0
    %v1005 = vpop.f32.mrb[0].mxu0
    %v1006 = vadd.f32 %v185, %v1005
    %v1007 = vpop.f32.mrb[0].mxu0
    %1008 = vmatprep.mubr.bf16.mxu0 %v547
    %1009 = vmatmul.mubr.bf16.gmra.mrb[0].mxu0 %v546
    %v1010 = vpop.f32.mrb[0].mxu0
    %v1011 = vadd.f32 %v185, %v1010
    %v1012 = vpop.f32.mrb[0].mxu0
    %v1013 = vpop.f32.mrb[0].mxu0
    %v1014 = vadd.f32 %v185, %v1013
    %v1015 = vpop.f32.mrb[0].mxu0
    %1016 = vmatprep.mubr.bf16.mxu0 %v550
    %1017 = vmatmul.mubr.bf16.gmra.mrb[0].mxu0 %v549
    %v1018 = vpop.f32.mrb[0].mxu0
    %v1019 = vadd.f32 %v185, %v1018
    %v1020 = vpop.f32.mrb[0].mxu0
    %v1021 = vpop.f32.mrb[0].mxu0
    %v1022 = vadd.f32 %v185, %v1021
    %v1023 = vpop.f32.mrb[0].mxu0
    %1024 = vmatprep.mubr.bf16.mxu0 %v553
    %1025 = vmatmul.mubr.bf16.gmra.mrb[0].mxu0 %v552
    %v1026 = vpop.f32.mrb[0].mxu0
    %v1027 = vadd.f32 %v185, %v1026
    %v1028 = vpop.f32.mrb[0].mxu0
    %v1029 = vpop.f32.mrb[0].mxu0
    %v1030 = vadd.f32 %v185, %v1029
    %v1031 = vpop.f32.mrb[0].mxu0
    %1032 = vmatprep.mubr.bf16.mxu0 %v556
    %1033 = vmatmul.mubr.bf16.gmra.mrb[0].mxu0 %v555
    %v1034 = vpop.f32.mrb[0].mxu0
    %v1035 = vadd.f32 %v185, %v1034
    %v1036 = vpop.f32.mrb[0].mxu0
    %v1037 = vpop.f32.mrb[0].mxu0
    %v1038 = vadd.f32 %v185, %v1037
    %v1039 = vpop.f32.mrb[0].mxu0
    %1040 = vmatprep.mubr.bf16.mxu0 %v559
    %1041 = vmatmul.mubr.bf16.gmra.mrb[0].mxu0 %v558
    %v1042 = vpop.f32.mrb[0].mxu0
    %v1043 = vadd.f32 %v185, %v1042
    %v1044 = vpop.f32.mrb[0].mxu0
    %v1045 = vpop.f32.mrb[0].mxu0
    %v1046 = vadd.f32 %v185, %v1045
    %v1047 = vpop.f32.mrb[0].mxu0
    %1048 = vmatprep.mubr.bf16.mxu0 %v562
    %1049 = vmatmul.mubr.bf16.gmra.mrb[0].mxu0 %v561
    %v1050 = vpop.f32.mrb[0].mxu0
    %v1051 = vadd.f32 %v185, %v1050
    %v1052 = vpop.f32.mrb[0].mxu0
    %v1053 = vpop.f32.mrb[0].mxu0
    %v1054 = vadd.f32 %v185, %v1053
    %v1055 = vpop.f32.mrb[0].mxu0
    %1056 = vmatprep.mubr.bf16.mxu0 %v565
    %1057 = vmatmul.mubr.bf16.gmra.mrb[0].mxu0 %v564
    %v1058 = vpop.f32.mrb[0].mxu0
    %v1059 = vadd.f32 %v185, %v1058
    %v1060 = vpop.f32.mrb[0].mxu0
    %v1061 = vpop.f32.mrb[0].mxu0
    %v1062 = vadd.f32 %v185, %v1061
    %v1063 = vpop.f32.mrb[0].mxu0
    %1064 = vmatprep.mubr.bf16.mxu0 %v568
    %1065 = vmatmul.mubr.bf16.gmra.mrb[0].mxu0 %v567
    %v1066 = vpop.f32.mrb[0].mxu0
    %v1067 = vadd.f32 %v185, %v1066
    %v1068 = vpop.f32.mrb[0].mxu0
    %v1069 = vpop.f32.mrb[0].mxu0
    %v1070 = vadd.f32 %v185, %v1069
    %v1071 = vpop.f32.mrb[0].mxu0
    %1072 = vmatprep.mubr.bf16.mxu0 %v571
    %1073 = vmatmul.mubr.bf16.gmra.mrb[0].mxu0 %v570
    %v1074 = vpop.f32.mrb[0].mxu0
    %v1075 = vadd.f32 %v185, %v1074
    %v1076 = vpop.f32.mrb[0].mxu0
    %v1077 = vpop.f32.mrb[0].mxu0
    %v1078 = vadd.f32 %v185, %v1077
    %v1079 = vpop.f32.mrb[0].mxu0
    %1080 = vmatprep.mubr.bf16.mxu0 %v574
    %1081 = vmatmul.mubr.bf16.gmra.mrb[0].mxu0 %v573
    %v1082 = vpop.f32.mrb[0].mxu0
    %v1083 = vadd.f32 %v185, %v1082
    %v1084 = vpop.f32.mrb[0].mxu0
    %v1085 = vpop.f32.mrb[0].mxu0
    %v1086 = vadd.f32 %v185, %v1085
    %v1087 = vpop.f32.mrb[0].mxu0
    %1088 = vmatprep.mubr.bf16.mxu0 %v577
    %1089 = vmatmul.mubr.bf16.gmra.mrb[0].mxu0 %v576
    %v1090 = vpop.f32.mrb[0].mxu0
    %v1091 = vadd.f32 %v185, %v1090
    %v1092 = vpop.f32.mrb[0].mxu0
    %v1093 = vpop.f32.mrb[0].mxu0
    %v1094 = vadd.f32 %v185, %v1093
    %v1095 = vpop.f32.mrb[0].mxu0
    %1096 = vmatprep.mubr.bf16.mxu0 %v580
    %1097 = vmatmul.mubr.bf16.gmra.mrb[0].mxu0 %v579
    %v1098 = vpop.f32.mrb[0].mxu0
    %v1099 = vadd.f32 %v185, %v1098
    %v1100 = vpop.f32.mrb[0].mxu0
    %v1101 = vpop.f32.mrb[0].mxu0
    %v1102 = vadd.f32 %v185, %v1101
    %v1103 = vpop.f32.mrb[0].mxu0
    %1104 = vmatprep.mubr.bf16.mxu0 %v583
    %1105 = vmatmul.mubr.bf16.gmra.mrb[0].mxu0 %v582
    %v1106 = vpop.f32.mrb[0].mxu0
    %v1107 = vadd.f32 %v185, %v1106
    %v1108 = vpop.f32.mrb[0].mxu0
    %v1109 = vpop.f32.mrb[0].mxu0
    %v1110 = vadd.f32 %v185, %v1109
    %v1111 = vpop.f32.mrb[0].mxu0
    %1112 = vmatprep.mubr.bf16.mxu0 %v586
    %1113 = vmatmul.mubr.bf16.gmra.mrb[0].mxu0 %v585
    %v1114 = vpop.f32.mrb[0].mxu0
    %v1115 = vadd.f32 %v185, %v1114
    %v1116 = vpop.f32.mrb[0].mxu0
    %v1117 = vpop.f32.mrb[0].mxu0
    %v1118 = vadd.f32 %v185, %v1117
    %v1119 = vpop.f32.mrb[0].mxu0
    %1120 = vmatprep.mubr.bf16.mxu0 %v589
    %1121 = vmatmul.mubr.bf16.gmra.mrb[0].mxu0 %v588
    %v1122 = vpop.f32.mrb[0].mxu0
    %v1123 = vadd.f32 %v185, %v1122
    %v1124 = vpop.f32.mrb[0].mxu0
    %v1125 = vpop.f32.mrb[0].mxu0
    %v1126 = vadd.f32 %v185, %v1125
    %v1127 = vpop.f32.mrb[0].mxu0
    %1128 = vmatprep.mubr.bf16.mxu0 %v592
    %1129 = vmatmul.mubr.bf16.gmra.mrb[0].mxu0 %v591
    %v1130 = vpop.f32.mrb[0].mxu0
    %v1131 = vadd.f32 %v185, %v1130
    %v1132 = vpop.f32.mrb[0].mxu0
    %v1133 = vpop.f32.mrb[0].mxu0
    %v1134 = vadd.f32 %v185, %v1133
    %v1135 = vpop.f32.mrb[0].mxu0
    %1136 = vmatprep.mubr.bf16.mxu0 %v595
    %1137 = vmatmul.mubr.bf16.gmra.mrb[0].mxu0 %v594
    %v1138 = vpop.f32.mrb[0].mxu0
    %v1139 = vadd.f32 %v185, %v1138
    %v1140 = vpop.f32.mrb[0].mxu0
    %v1141 = vpop.f32.mrb[0].mxu0
    %v1142 = vadd.f32 %v185, %v1141
    %v1143 = vpop.f32.mrb[0].mxu0
    %1144 = vmatprep.mubr.bf16.mxu0 %v598
    %1145 = vmatmul.mubr.bf16.gmra.mrb[0].mxu0 %v597
    %v1146 = vpop.f32.mrb[0].mxu0
    %v1147 = vadd.f32 %v185, %v1146
    %v1148 = vpop.f32.mrb[0].mxu0
    %v1149 = vpop.f32.mrb[0].mxu0
    %v1150 = vadd.f32 %v185, %v1149
    %v1151 = vpop.f32.mrb[0].mxu0
    %1152 = vmatprep.mubr.bf16.mxu0 %v601
    %1153 = vmatmul.mubr.bf16.gmra.mrb[0].mxu0 %v600
    %v1154 = vpop.f32.mrb[0].mxu0
    %v1155 = vadd.f32 %v185, %v1154
    %v1156 = vpop.f32.mrb[0].mxu0
    %v1157 = vpop.f32.mrb[0].mxu0
    %v1158 = vadd.f32 %v185, %v1157
    %v1159 = vpop.f32.mrb[0].mxu0
    %1160 = vdwg.mxu0
    %1161 = vmatprep.subr.bf16.mxu0 0
    %1162 = vmatpush1.bf16.msra.mxu0 %v755
    %1163 = vmatprep.subr.bf16.mxu0 0
    %1164 = vmatpush1.bf16.msra.mxu0 %v756
    %1165 = vmatprep.subr.bf16.mxu0 0
    %1166 = vmatpush1.bf16.msra.mxu0 0
    %1167 = vmatprep.subr.bf16.mxu0 0
    %1168 = vmatpush1.bf16.msra.mxu0 0
    %1169 = vmatprep.subr.bf16.mxu0 0
    %1170 = vmatpush1.bf16.msra.mxu0 0
    %1171 = vmatprep.subr.bf16.mxu0 0
    %1172 = vmatpush1.bf16.msra.mxu0 0
    %1173 = vmatprep.subr.bf16.mxu0 0
    %1174 = vmatpush1.bf16.msra.mxu0 0
    %1175 = vmatprep.subr.bf16.mxu0 0
    %1176 = vmatpush1.bf16.msra.mxu0 0
    %1177 = vmatprep.subr.bf16.mxu0 0
    %1178 = vmatpush1.bf16.msra.mxu0 0
    %1179 = vmatprep.subr.bf16.mxu0 0
    %1180 = vmatpush1.bf16.msra.mxu0 0
    %1181 = vmatprep.subr.bf16.mxu0 0
    %1182 = vmatpush1.bf16.msra.mxu0 0
    %1183 = vmatprep.subr.bf16.mxu0 0
    %1184 = vmatpush1.bf16.msra.mxu0 0
    %1185 = vmatprep.subr.bf16.mxu0 0
    %1186 = vmatpush1.bf16.msra.mxu0 0
    %1187 = vmatprep.subr.bf16.mxu0 0
    %1188 = vmatpush1.bf16.msra.mxu0 0
    %1189 = vmatprep.subr.bf16.mxu0 0
    %1190 = vmatpush1.bf16.msra.mxu0 0
    %1191 = vmatprep.subr.bf16.mxu0 0
    %1192 = vmatpush1.bf16.msra.mxu0 0
    %1193 = vmatprep.mubr.bf16.mxu0 0
    %1194 = vmatmul.mubr.bf16.gmra.mrb[0].mxu0 %v777
    %v1195 = vpop.f32.mrb[0].mxu0
    %v1196 = vadd.f32 %v907, %v1195
    %v1197 = vpop.f32.mrb[0].mxu0
    %v1198 = vpop.f32.mrb[0].mxu0
    %v1199 = vadd.f32 %v910, %v1198
    %v1200 = vpop.f32.mrb[0].mxu0
    %1201 = vmatprep.mubr.bf16.mxu0 0
    %1202 = vmatmul.mubr.bf16.gmra.mrb[0].mxu0 %v780
    %v1203 = vpop.f32.mrb[0].mxu0
    %v1204 = vadd.f32 %v915, %v1203
    %v1205 = vpop.f32.mrb[0].mxu0
    %v1206 = vpop.f32.mrb[0].mxu0
    %v1207 = vadd.f32 %v918, %v1206
    %v1208 = vpop.f32.mrb[0].mxu0
    %1209 = vmatprep.mubr.bf16.mxu0 0
    %1210 = vmatmul.mubr.bf16.gmra.mrb[0].mxu0 %v783
    %v1211 = vpop.f32.mrb[0].mxu0
    %v1212 = vadd.f32 %v923, %v1211
    %v1213 = vpop.f32.mrb[0].mxu0
    %v1214 = vpop.f32.mrb[0].mxu0
    %v1215 = vadd.f32 %v926, %v1214
    %v1216 = vpop.f32.mrb[0].mxu0
    %1217 = vmatprep.mubr.bf16.mxu0 0
    %1218 = vmatmul.mubr.bf16.gmra.mrb[0].mxu0 %v786
    %v1219 = vpop.f32.mrb[0].mxu0
    %v1220 = vadd.f32 %v931, %v1219
    %v1221 = vpop.f32.mrb[0].mxu0
    %v1222 = vpop.f32.mrb[0].mxu0
    %v1223 = vadd.f32 %v934, %v1222
    %v1224 = vpop.f32.mrb[0].mxu0
    %1225 = vmatprep.mubr.bf16.mxu0 0
    %1226 = vmatmul.mubr.bf16.gmra.mrb[0].mxu0 %v789
    %v1227 = vpop.f32.mrb[0].mxu0
    %v1228 = vadd.f32 %v939, %v1227
    %v1229 = vpop.f32.mrb[0].mxu0
    %v1230 = vpop.f32.mrb[0].mxu0
    %v1231 = vadd.f32 %v942, %v1230
    %v1232 = vpop.f32.mrb[0].mxu0
    %1233 = vmatprep.mubr.bf16.mxu0 0
    %1234 = vmatmul.mubr.bf16.gmra.mrb[0].mxu0 %v792
    %v1235 = vpop.f32.mrb[0].mxu0
    %v1236 = vadd.f32 %v947, %v1235
    %v1237 = vpop.f32.mrb[0].mxu0
    %v1238 = vpop.f32.mrb[0].mxu0
    %v1239 = vadd.f32 %v950, %v1238
    %v1240 = vpop.f32.mrb[0].mxu0
    %1241 = vmatprep.mubr.bf16.mxu0 0
    %1242 = vmatmul.mubr.bf16.gmra.mrb[0].mxu0 %v795
    %v1243 = vpop.f32.mrb[0].mxu0
    %v1244 = vadd.f32 %v955, %v1243
    %v1245 = vpop.f32.mrb[0].mxu0
    %v1246 = vpop.f32.mrb[0].mxu0
    %v1247 = vadd.f32 %v958, %v1246
    %v1248 = vpop.f32.mrb[0].mxu0
    %1249 = vmatprep.mubr.bf16.mxu0 0
    %1250 = vmatmul.mubr.bf16.gmra.mrb[0].mxu0 %v798
    %v1251 = vpop.f32.mrb[0].mxu0
    %v1252 = vadd.f32 %v963, %v1251
    %v1253 = vpop.f32.mrb[0].mxu0
    %v1254 = vpop.f32.mrb[0].mxu0
    %v1255 = vadd.f32 %v966, %v1254
    %v1256 = vpop.f32.mrb[0].mxu0
    %1257 = vmatprep.mubr.bf16.mxu0 0
    %1258 = vmatmul.mubr.bf16.gmra.mrb[0].mxu0 %v801
    %v1259 = vpop.f32.mrb[0].mxu0
    %v1260 = vadd.f32 %v971, %v1259
    %v1261 = vpop.f32.mrb[0].mxu0
    %v1262 = vpop.f32.mrb[0].mxu0
    %v1263 = vadd.f32 %v974, %v1262
    %v1264 = vpop.f32.mrb[0].mxu0
    %1265 = vmatprep.mubr.bf16.mxu0 0
    %1266 = vmatmul.mubr.bf16.gmra.mrb[0].mxu0 %v804
    %v1267 = vpop.f32.mrb[0].mxu0
    %v1268 = vadd.f32 %v979, %v1267
    %v1269 = vpop.f32.mrb[0].mxu0
    %v1270 = vpop.f32.mrb[0].mxu0
    %v1271 = vadd.f32 %v982, %v1270
    %v1272 = vpop.f32.mrb[0].mxu0
    %1273 = vmatprep.mubr.bf16.mxu0 0
    %1274 = vmatmul.mubr.bf16.gmra.mrb[0].mxu0 %v807
    %v1275 = vpop.f32.mrb[0].mxu0
    %v1276 = vadd.f32 %v987, %v1275
    %v1277 = vpop.f32.mrb[0].mxu0
    %v1278 = vpop.f32.mrb[0].mxu0
    %v1279 = vadd.f32 %v990, %v1278
    %v1280 = vpop.f32.mrb[0].mxu0
    %1281 = vmatprep.mubr.bf16.mxu0 0
    %1282 = vmatmul.mubr.bf16.gmra.mrb[0].mxu0 %v810
    %v1283 = vpop.f32.mrb[0].mxu0
    %v1284 = vadd.f32 %v995, %v1283
    %v1285 = vpop.f32.mrb[0].mxu0
    %v1286 = vpop.f32.mrb[0].mxu0
    %v1287 = vadd.f32 %v998, %v1286
    %v1288 = vpop.f32.mrb[0].mxu0
    %1289 = vmatprep.mubr.bf16.mxu0 0
    %1290 = vmatmul.mubr.bf16.gmra.mrb[0].mxu0 %v813
    %v1291 = vpop.f32.mrb[0].mxu0
    %v1292 = vadd.f32 %v1003, %v1291
    %v1293 = vpop.f32.mrb[0].mxu0
    %v1294 = vpop.f32.mrb[0].mxu0
    %v1295 = vadd.f32 %v1006, %v1294
    %v1296 = vpop.f32.mrb[0].mxu0
    %1297 = vmatprep.mubr.bf16.mxu0 0
    %1298 = vmatmul.mubr.bf16.gmra.mrb[0].mxu0 %v816
    %v1299 = vpop.f32.mrb[0].mxu0
    %v1300 = vadd.f32 %v1011, %v1299
    %v1301 = vpop.f32.mrb[0].mxu0
    %v1302 = vpop.f32.mrb[0].mxu0
    %v1303 = vadd.f32 %v1014, %v1302
    %v1304 = vpop.f32.mrb[0].mxu0
    %1305 = vmatprep.mubr.bf16.mxu0 0
    %1306 = vmatmul.mubr.bf16.gmra.mrb[0].mxu0 %v819
    %v1307 = vpop.f32.mrb[0].mxu0
    %v1308 = vadd.f32 %v1019, %v1307
    %v1309 = vpop.f32.mrb[0].mxu0
    %v1310 = vpop.f32.mrb[0].mxu0
    %v1311 = vadd.f32 %v1022, %v1310
    %v1312 = vpop.f32.mrb[0].mxu0
    %1313 = vmatprep.mubr.bf16.mxu0 0
    %1314 = vmatmul.mubr.bf16.gmra.mrb[0].mxu0 %v822
    %v1315 = vpop.f32.mrb[0].mxu0
    %v1316 = vadd.f32 %v1027, %v1315
    %v1317 = vpop.f32.mrb[0].mxu0
    %v1318 = vpop.f32.mrb[0].mxu0
    %v1319 = vadd.f32 %v1030, %v1318
    %v1320 = vpop.f32.mrb[0].mxu0
    %1321 = vmatprep.mubr.bf16.mxu0 0
    %1322 = vmatmul.mubr.bf16.gmra.mrb[0].mxu0 %v825
    %v1323 = vpop.f32.mrb[0].mxu0
    %v1324 = vadd.f32 %v1035, %v1323
    %v1325 = vpop.f32.mrb[0].mxu0
    %v1326 = vpop.f32.mrb[0].mxu0
    %v1327 = vadd.f32 %v1038, %v1326
    %v1328 = vpop.f32.mrb[0].mxu0
    %1329 = vmatprep.mubr.bf16.mxu0 0
    %1330 = vmatmul.mubr.bf16.gmra.mrb[0].mxu0 %v828
    %v1331 = vpop.f32.mrb[0].mxu0
    %v1332 = vadd.f32 %v1043, %v1331
    %v1333 = vpop.f32.mrb[0].mxu0
    %v1334 = vpop.f32.mrb[0].mxu0
    %v1335 = vadd.f32 %v1046, %v1334
    %v1336 = vpop.f32.mrb[0].mxu0
    %1337 = vmatprep.mubr.bf16.mxu0 0
    %1338 = vmatmul.mubr.bf16.gmra.mrb[0].mxu0 %v831
    %v1339 = vpop.f32.mrb[0].mxu0
    %v1340 = vadd.f32 %v1051, %v1339
    %v1341 = vpop.f32.mrb[0].mxu0
    %v1342 = vpop.f32.mrb[0].mxu0
    %v1343 = vadd.f32 %v1054, %v1342
    %v1344 = vpop.f32.mrb[0].mxu0
    %1345 = vmatprep.mubr.bf16.mxu0 0
    %1346 = vmatmul.mubr.bf16.gmra.mrb[0].mxu0 %v834
    %v1347 = vpop.f32.mrb[0].mxu0
    %v1348 = vadd.f32 %v1059, %v1347
    %v1349 = vpop.f32.mrb[0].mxu0
    %v1350 = vpop.f32.mrb[0].mxu0
    %v1351 = vadd.f32 %v1062, %v1350
    %v1352 = vpop.f32.mrb[0].mxu0
    %1353 = vmatprep.mubr.bf16.mxu0 0
    %1354 = vmatmul.mubr.bf16.gmra.mrb[0].mxu0 %v837
    %v1355 = vpop.f32.mrb[0].mxu0
    %v1356 = vadd.f32 %v1067, %v1355
    %v1357 = vpop.f32.mrb[0].mxu0
    %v1358 = vpop.f32.mrb[0].mxu0
    %v1359 = vadd.f32 %v1070, %v1358
    %v1360 = vpop.f32.mrb[0].mxu0
    %1361 = vmatprep.mubr.bf16.mxu0 0
    %1362 = vmatmul.mubr.bf16.gmra.mrb[0].mxu0 %v840
    %v1363 = vpop.f32.mrb[0].mxu0
    %v1364 = vadd.f32 %v1075, %v1363
    %v1365 = vpop.f32.mrb[0].mxu0
    %v1366 = vpop.f32.mrb[0].mxu0
    %v1367 = vadd.f32 %v1078, %v1366
    %v1368 = vpop.f32.mrb[0].mxu0
    %1369 = vmatprep.mubr.bf16.mxu0 0
    %1370 = vmatmul.mubr.bf16.gmra.mrb[0].mxu0 %v843
    %v1371 = vpop.f32.mrb[0].mxu0
    %v1372 = vadd.f32 %v1083, %v1371
    %v1373 = vpop.f32.mrb[0].mxu0
    %v1374 = vpop.f32.mrb[0].mxu0
    %v1375 = vadd.f32 %v1086, %v1374
    %v1376 = vpop.f32.mrb[0].mxu0
    %1377 = vmatprep.mubr.bf16.mxu0 0
    %1378 = vmatmul.mubr.bf16.gmra.mrb[0].mxu0 %v846
    %v1379 = vpop.f32.mrb[0].mxu0
    %v1380 = vadd.f32 %v1091, %v1379
    %v1381 = vpop.f32.mrb[0].mxu0
    %v1382 = vpop.f32.mrb[0].mxu0
    %v1383 = vadd.f32 %v1094, %v1382
    %v1384 = vpop.f32.mrb[0].mxu0
    %1385 = vmatprep.mubr.bf16.mxu0 0
    %1386 = vmatmul.mubr.bf16.gmra.mrb[0].mxu0 %v849
    %v1387 = vpop.f32.mrb[0].mxu0
    %v1388 = vadd.f32 %v1099, %v1387
    %v1389 = vpop.f32.mrb[0].mxu0
    %v1390 = vpop.f32.mrb[0].mxu0
    %v1391 = vadd.f32 %v1102, %v1390
    %v1392 = vpop.f32.mrb[0].mxu0
    %1393 = vmatprep.mubr.bf16.mxu0 0
    %1394 = vmatmul.mubr.bf16.gmra.mrb[0].mxu0 %v852
    %v1395 = vpop.f32.mrb[0].mxu0
    %v1396 = vadd.f32 %v1107, %v1395
    %v1397 = vpop.f32.mrb[0].mxu0
    %v1398 = vpop.f32.mrb[0].mxu0
    %v1399 = vadd.f32 %v1110, %v1398
    %v1400 = vpop.f32.mrb[0].mxu0
    %1401 = vmatprep.mubr.bf16.mxu0 0
    %1402 = vmatmul.mubr.bf16.gmra.mrb[0].mxu0 %v855
    %v1403 = vpop.f32.mrb[0].mxu0
    %v1404 = vadd.f32 %v1115, %v1403
    %v1405 = vpop.f32.mrb[0].mxu0
    %v1406 = vpop.f32.mrb[0].mxu0
    %v1407 = vadd.f32 %v1118, %v1406
    %v1408 = vpop.f32.mrb[0].mxu0
    %1409 = vmatprep.mubr.bf16.mxu0 0
    %1410 = vmatmul.mubr.bf16.gmra.mrb[0].mxu0 %v858
    %v1411 = vpop.f32.mrb[0].mxu0
    %v1412 = vadd.f32 %v1123, %v1411
    %v1413 = vpop.f32.mrb[0].mxu0
    %v1414 = vpop.f32.mrb[0].mxu0
    %v1415 = vadd.f32 %v1126, %v1414
    %v1416 = vpop.f32.mrb[0].mxu0
    %1417 = vmatprep.mubr.bf16.mxu0 0
    %1418 = vmatmul.mubr.bf16.gmra.mrb[0].mxu0 %v861
    %v1419 = vpop.f32.mrb[0].mxu0
    %v1420 = vadd.f32 %v1131, %v1419
    %v1421 = vpop.f32.mrb[0].mxu0
    %v1422 = vpop.f32.mrb[0].mxu0
    %v1423 = vadd.f32 %v1134, %v1422
    %v1424 = vpop.f32.mrb[0].mxu0
    %1425 = vmatprep.mubr.bf16.mxu0 0
    %1426 = vmatmul.mubr.bf16.gmra.mrb[0].mxu0 %v864
    %v1427 = vpop.f32.mrb[0].mxu0
    %v1428 = vadd.f32 %v1139, %v1427
    %v1429 = vpop.f32.mrb[0].mxu0
    %v1430 = vpop.f32.mrb[0].mxu0
    %v1431 = vadd.f32 %v1142, %v1430
    %v1432 = vpop.f32.mrb[0].mxu0
    %1433 = vmatprep.mubr.bf16.mxu0 0
    %1434 = vmatmul.mubr.bf16.gmra.mrb[0].mxu0 %v867
    %v1435 = vpop.f32.mrb[0].mxu0
    %v1436 = vadd.f32 %v1147, %v1435
    %v1437 = vpop.f32.mrb[0].mxu0
    %v1438 = vpop.f32.mrb[0].mxu0
    %v1439 = vadd.f32 %v1150, %v1438
    %v1440 = vpop.f32.mrb[0].mxu0
    %1441 = vmatprep.mubr.bf16.mxu0 0
    %1442 = vmatmul.mubr.bf16.gmra.mrb[0].mxu0 %v870
    %v1443 = vpop.f32.mrb[0].mxu0
    %v1444 = vadd.f32 %v1155, %v1443
    %v1445 = vpop.f32.mrb[0].mxu0
    %v1446 = vpop.f32.mrb[0].mxu0
    %v1447 = vadd.f32 %v1158, %v1446
    %v1448 = vpop.f32.mrb[0].mxu0
    %1449 = vdwg.mxu0
    %v1450 = vmax.f32 %v1196, 0.0
    %v1451 = vmax.f32 %v1199, 0.0
    %v1452 = vmax.f32 %v1204, 0.0
    %v1453 = vmax.f32 %v1207, 0.0
    %v1454 = vmax.f32 %v1212, 0.0
    %v1455 = vmax.f32 %v1215, 0.0
    %v1456 = vmax.f32 %v1220, 0.0
    %v1457 = vmax.f32 %v1223, 0.0
    %v1458 = vmax.f32 %v1228, 0.0
    %v1459 = vmax.f32 %v1231, 0.0
    %v1460 = vmax.f32 %v1236, 0.0
    %v1461 = vmax.f32 %v1239, 0.0
    %v1462 = vmax.f32 %v1244, 0.0
    %v1463 = vmax.f32 %v1247, 0.0
    %v1464 = vmax.f32 %v1252, 0.0
    %v1465 = vmax.f32 %v1255, 0.0
    %v1466 = vmax.f32 %v1260, 0.0
    %v1467 = vmax.f32 %v1263, 0.0
    %v1468 = vmax.f32 %v1268, 0.0
    %v1469 = vmax.f32 %v1271, 0.0
    %v1470 = vmax.f32 %v1276, 0.0
    %v1471 = vmax.f32 %v1279, 0.0
    %v1472 = vmax.f32 %v1284, 0.0
    %v1473 = vmax.f32 %v1287, 0.0
    %v1474 = vmax.f32 %v1292, 0.0
    %v1475 = vmax.f32 %v1295, 0.0
    %v1476 = vmax.f32 %v1300, 0.0
    %v1477 = vmax.f32 %v1303, 0.0
    %v1478 = vmax.f32 %v1308, 0.0
    %v1479 = vmax.f32 %v1311, 0.0
    %v1480 = vmax.f32 %v1316, 0.0
    %v1481 = vmax.f32 %v1319, 0.0
    %v1482 = vmax.f32 %v1324, 0.0
    %v1483 = vmax.f32 %v1327, 0.0
    %v1484 = vmax.f32 %v1332, 0.0
    %v1485 = vmax.f32 %v1335, 0.0
    %v1486 = vmax.f32 %v1340, 0.0
    %v1487 = vmax.f32 %v1343, 0.0
    %v1488 = vmax.f32 %v1348, 0.0
    %v1489 = vmax.f32 %v1351, 0.0
    %v1490 = vmax.f32 %v1356, 0.0
    %v1491 = vmax.f32 %v1359, 0.0
    %v1492 = vmax.f32 %v1364, 0.0
    %v1493 = vmax.f32 %v1367, 0.0
    %v1494 = vmax.f32 %v1372, 0.0
    %v1495 = vmax.f32 %v1375, 0.0
    %v1496 = vmax.f32 %v1380, 0.0
    %v1497 = vmax.f32 %v1383, 0.0
    %v1498 = vmax.f32 %v1388, 0.0
    %v1499 = vmax.f32 %v1391, 0.0
    %v1500 = vmax.f32 %v1396, 0.0
    %v1501 = vmax.f32 %v1399, 0.0
    %v1502 = vmax.f32 %v1404, 0.0
    %v1503 = vmax.f32 %v1407, 0.0
    %v1504 = vmax.f32 %v1412, 0.0
    %v1505 = vmax.f32 %v1415, 0.0
    %v1506 = vmax.f32 %v1420, 0.0
    %v1507 = vmax.f32 %v1423, 0.0
    %v1508 = vmax.f32 %v1428, 0.0
    %v1509 = vmax.f32 %v1431, 0.0
    %v1510 = vmax.f32 %v1436, 0.0
    %v1511 = vmax.f32 %v1439, 0.0
    %v1512 = vmax.f32 %v1444, 0.0
    %v1513 = vmax.f32 %v1447, 0.0
    %1514 = vst [vmem:[#allocation2] sm:$0xff] %v1450
    %1515 = vst [vmem:[#allocation2 + $0x8] sm:$0xff] %v1451
    %1516 = vst [vmem:[#allocation2 + $0x10] sm:$0xff] %v1452
    %1517 = vst [vmem:[#allocation2 + $0x18] sm:$0xff] %v1453
    %1518 = vst [vmem:[#allocation2 + $0x20] sm:$0xff] %v1454
    %1519 = vst [vmem:[#allocation2 + $0x28] sm:$0xff] %v1455
    %1520 = vst [vmem:[#allocation2 + $0x30] sm:$0xff] %v1456
    %1521 = vst [vmem:[#allocation2 + $0x38] sm:$0xff] %v1457
    %1522 = vst [vmem:[#allocation2 + $0x40] sm:$0xff] %v1458
    %1523 = vst [vmem:[#allocation2 + $0x48] sm:$0xff] %v1459
    %1524 = vst [vmem:[#allocation2 + $0x50] sm:$0xff] %v1460
    %1525 = vst [vmem:[#allocation2 + $0x58] sm:$0xff] %v1461
    %1526 = vst [vmem:[#allocation2 + $0x60] sm:$0xff] %v1462
    %1527 = vst [vmem:[#allocation2 + $0x68] sm:$0xff] %v1463
    %1528 = vst [vmem:[#allocation2 + $0x70] sm:$0xff] %v1464
    %1529 = vst [vmem:[#allocation2 + $0x78] sm:$0xff] %v1465
    %1530 = vst [vmem:[#allocation2 + $0x80] sm:$0xff] %v1466
    %1531 = vst [vmem:[#allocation2 + $0x88] sm:$0xff] %v1467
    %1532 = vst [vmem:[#allocation2 + $0x90] sm:$0xff] %v1468
    %1533 = vst [vmem:[#allocation2 + $0x98] sm:$0xff] %v1469
    %1534 = vst [vmem:[#allocation2 + $0xa0] sm:$0xff] %v1470
    %1535 = vst [vmem:[#allocation2 + $0xa8] sm:$0xff] %v1471
    %1536 = vst [vmem:[#allocation2 + $0xb0] sm:$0xff] %v1472
    %1537 = vst [vmem:[#allocation2 + $0xb8] sm:$0xff] %v1473
    %1538 = vst [vmem:[#allocation2 + $0xc0] sm:$0xff] %v1474
    %1539 = vst [vmem:[#allocation2 + $0xc8] sm:$0xff] %v1475
    %1540 = vst [vmem:[#allocation2 + $0xd0] sm:$0xff] %v1476
    %1541 = vst [vmem:[#allocation2 + $0xd8] sm:$0xff] %v1477
    %1542 = vst [vmem:[#allocation2 + $0xe0] sm:$0xff] %v1478
    %1543 = vst [vmem:[#allocation2 + $0xe8] sm:$0xff] %v1479
    %1544 = vst [vmem:[#allocation2 + $0xf0] sm:$0xff] %v1480
    %1545 = vst [vmem:[#allocation2 + $0xf8] sm:$0xff] %v1481
    %1546 = vst [vmem:[#allocation2 + $0x100] sm:$0xff] %v1482
    %1547 = vst [vmem:[#allocation2 + $0x108] sm:$0xff] %v1483
    %1548 = vst [vmem:[#allocation2 + $0x110] sm:$0xff] %v1484
    %1549 = vst [vmem:[#allocation2 + $0x118] sm:$0xff] %v1485
    %1550 = vst [vmem:[#allocation2 + $0x120] sm:$0xff] %v1486
    %1551 = vst [vmem:[#allocation2 + $0x128] sm:$0xff] %v1487
    %1552 = vst [vmem:[#allocation2 + $0x130] sm:$0xff] %v1488
    %1553 = vst [vmem:[#allocation2 + $0x138] sm:$0xff] %v1489
    %1554 = vst [vmem:[#allocation2 + $0x140] sm:$0xff] %v1490
    %1555 = vst [vmem:[#allocation2 + $0x148] sm:$0xff] %v1491
    %1556 = vst [vmem:[#allocation2 + $0x150] sm:$0xff] %v1492
    %1557 = vst [vmem:[#allocation2 + $0x158] sm:$0xff] %v1493
    %1558 = vst [vmem:[#allocation2 + $0x160] sm:$0xff] %v1494
    %1559 = vst [vmem:[#allocation2 + $0x168] sm:$0xff] %v1495
    %1560 = vst [vmem:[#allocation2 + $0x170] sm:$0xff] %v1496
    %1561 = vst [vmem:[#allocation2 + $0x178] sm:$0xff] %v1497
    %1562 = vst [vmem:[#allocation2 + $0x180] sm:$0xff] %v1498
    %1563 = vst [vmem:[#allocation2 + $0x188] sm:$0xff] %v1499
    %1564 = vst [vmem:[#allocation2 + $0x190] sm:$0xff] %v1500
    %1565 = vst [vmem:[#allocation2 + $0x198] sm:$0xff] %v1501
    %1566 = vst [vmem:[#allocation2 + $0x1a0] sm:$0xff] %v1502
    %1567 = vst [vmem:[#allocation2 + $0x1a8] sm:$0xff] %v1503
    %1568 = vst [vmem:[#allocation2 + $0x1b0] sm:$0xff] %v1504
    %1569 = vst [vmem:[#allocation2 + $0x1b8] sm:$0xff] %v1505
    %1570 = vst [vmem:[#allocation2 + $0x1c0] sm:$0xff] %v1506
    %1571 = vst [vmem:[#allocation2 + $0x1c8] sm:$0xff] %v1507
    %1572 = vst [vmem:[#allocation2 + $0x1d0] sm:$0xff] %v1508
    %1573 = vst [vmem:[#allocation2 + $0x1d8] sm:$0xff] %v1509
    %1574 = vst [vmem:[#allocation2 + $0x1e0] sm:$0xff] %v1510
    %1575 = vst [vmem:[#allocation2 + $0x1e8] sm:$0xff] %v1511
    %1576 = vst [vmem:[#allocation2 + $0x1f0] sm:$0xff] %v1512
    %1577 = vst [vmem:[#allocation2 + $0x1f8] sm:$0xff] %v1513
    // Predicated region
    $region14: #{improved_compressor_forward.21} parent=1 // pred_check
      _
    $region15: #{improved_compressor_forward.21} parent=1 // pred_check_branch
      %1579 = sbr.rel (0) target = $region17
    $region16: #{improved_compressor_forward.21} parent=1 // pred_region
      %s1581 = ssub.s32 8192, 8192
      %1582 = vsyncadd [#allocation3], %s1581
      %s1583 = sshll.u32 [#allocation2], 4
      %s1584 = int_to_ptr.vmem [resolvable:$true] %s1583
      %1589 = dma.vmem_to_hbm [thread:$0]  %s1584, 8192, %s3, [#allocation3], 128, 128, 8
    $region17: #{improved_compressor_forward.21} parent=1 // pred_fallthru
      _
    // Predicated region
    $region18: #{improved_compressor_forward.21} parent=1 // pred_check
      _
    $region19: #{improved_compressor_forward.21} parent=1 // pred_check_branch
      %1591 = sbr.rel (0) target = $region21
    $region20: #{improved_compressor_forward.21} parent=1 // pred_region
      %1592 = dma.done [#allocation3], 8192
    $region21: #{improved_compressor_forward.21} parent=1 // pred_fallthru
      _
    %1593 = vsyncpa [#allocation3], 1

</llo_original>
